<compile_context>
chip_gen: v6e
topology: v6e:2x2x1
jax: 0.10.0
libtpu: 0.0.40
codegen_flags: <defaults>
</compile_context>

<pallas_src>
import functools

import jax
import jax.numpy as jnp
import numpy as np
from jax.experimental import pallas as pl
from jax.experimental.pallas import tpu as pltpu


def _pam_kernel(x_ref, w_ref, b_ref, alpha_ref, out_ref, proj_ref, *,
                c, c8, tile_m):
    # x_ref:    (N, C)        f32   full batch element (same block across m)
    # w_ref:    (C, C+2*C8)   bf16  packed [Wd | Wb | Wc]
    # b_ref:    (1, C+2*C8)   f32   packed [bd | bb | bc]
    # alpha_ref:(1, 1)        f32   SMEM scalar
    # out_ref:  (TILE_M, C)   f32   query tile of the output
    # proj_ref: (N, C+2*C8)   bf16  VMEM scratch holding [fd | fb | fc]
    m = pl.program_id(1)

    # Compute all three projections once per batch element with a single wide
    # (lane-dense) matmul; result stays resident in VMEM across the m axis.
    @pl.when(m == 0)
    def _():
        xb = x_ref[...].astype(jnp.bfloat16)
        p = jnp.dot(xb, w_ref[...], preferred_element_type=jnp.float32)
        proj_ref[...] = (p + b_ref[...]).astype(jnp.bfloat16)

    row0 = pl.multiple_of(m * tile_m, tile_m)

    p_full = proj_ref[...]                                   # (N, C+2*C8) bf16
    p_tile = proj_ref[pl.ds(row0, tile_m), :]                # (TILE_M, C+2*C8)
    fd = p_full[:, :c]                                       # (N, C)       bf16
    fc = p_full[:, c + c8:c + 2 * c8]                        # (N, C8)      bf16
    fb = p_tile[:, c:c + c8]                                 # (TILE_M, C8) bf16

    # logits[i, j] = fb[i, :] . fc[j, :]  (contract the C/8 axis; no transpose)
    logits = jax.lax.dot_general(
        fb, fc, (((1,), (1,)), ((), ())),
        preferred_element_type=jnp.float32)                  # (TILE_M, N)

    # numerically-stable softmax over keys; divide via EUP approx reciprocal.
    mx = jnp.max(logits, axis=-1, keepdims=True)
    e = jnp.exp(logits - mx)
    s = jnp.sum(e, axis=-1, keepdims=True)
    attn = e * pl.reciprocal(s, approx=True)                 # (TILE_M, N)

    # feat_e tile: fe[i, c] = sum_j attn[i, j] * fd[j, c]
    fe = jnp.dot(attn.astype(jnp.bfloat16), fd,
                 preferred_element_type=jnp.float32)         # (TILE_M, C)

    x_t = x_ref[pl.ds(row0, tile_m), :]                      # (TILE_M, C) f32
    out_ref[...] = alpha_ref[0, 0] * fe + x_t


def pam_pack_params(wb, bb, wc, bc, wd, bd):
    """Pack the three 1x1-conv projections into one wide matmul.

    Weights are stored (C_in, C_out).  Column layout is [Wd | Wb | Wc] so the
    wide feat_d slab sits at lane offset 0.  Weights are cast to bf16 once
    here (MXU operands), biases stay f32 (added to the f32 accumulator).
    """
    w_pack = jnp.concatenate([wd, wb, wc], axis=1).astype(jnp.bfloat16)
    b_pack = jnp.concatenate([bd, bb, bc], axis=1).astype(jnp.float32)
    return w_pack, b_pack


def _choose_tile_m(n, cap):
    for t in range(min(cap, n), 7, -1):
        if n % t == 0 and t % 8 == 0:
            return t
    return n


def position_attention_bnc(x_bnc, w_pack, b_pack, alpha, c8, *, tile_m=128):
    """Core entry point: x_bnc is (B, N, C) f32 (pixels-major)."""
    B, N, C = x_bnc.shape
    w_tot = C + 2 * c8
    assert w_pack.shape == (C, w_tot) and b_pack.shape == (1, w_tot)

    # Pick the query-tile size.  Production guidance: size per generation so
    # TILE_M*N f32 logits + resident (N, C+2*C8) bf16 scratch + double-buffered
    # (TILE_M, C) blocks stay under ~48 MiB (v7x has only 64 MiB VMEM); target
    # TILE_M <= 1024 on v7x, larger on v5e/v6e.
    tile_m = _choose_tile_m(N, tile_m)
    n_tiles = N // tile_m

    full = lambda b, m: (0, 0)

    # Advisory cost estimate so XLA schedules surrounding ops sensibly.
    flops = B * (2 * N * C * w_tot        # fused projections
                 + 2 * N * N * c8         # logits
                 + 2 * N * N * C          # feat_e
                 + 4 * N * C)             # scale + residual
    bytes_accessed = B * N * C * 4 * 2 + C * w_tot * 2 + w_tot * 4 + 4

    out_bnc = pl.pallas_call(
        functools.partial(_pam_kernel, c=C, c8=c8, tile_m=tile_m),
        out_shape=jax.ShapeDtypeStruct((B, N, C), jnp.float32),
        grid=(B, n_tiles),
        in_specs=[
            # full batch element, re-DMAed only when b changes
            pl.BlockSpec((None, N, C), lambda b, m: (b, 0, 0)),      # x
            pl.BlockSpec((C, w_tot), full),                          # W_pack (bf16)
            pl.BlockSpec((1, w_tot), full),                          # b_pack (f32)
            pl.BlockSpec((1, 1), full,
                         memory_space=pltpu.MemorySpace.SMEM),       # alpha
        ],
        out_specs=pl.BlockSpec((None, tile_m, C), lambda b, m: (b, m, 0)),
        scratch_shapes=[pltpu.VMEM((N, w_tot), jnp.bfloat16)],       # [fd|fb|fc]
        compiler_params=pltpu.CompilerParams(
            dimension_semantics=("parallel", "arbitrary"),
            vmem_limit_bytes=48 * 1024 * 1024),                      # headroom on v7x (64 MiB)
        cost_estimate=pl.CostEstimate(flops=flops,
                                      transcendentals=B * N * N,
                                      bytes_accessed=bytes_accessed),
    )(x_bnc, w_pack, b_pack, alpha)
    return out_bnc


def position_attention(x_nchw, wb, bb, wc, bc, wd, bd, alpha, *, tile_m=128):
    """NCHW wrapper for parity with the PyTorch module.

    Prefer calling position_attention_bnc with (B, N, C) / NHWC data directly:
    the transposes here are an extra full-tensor HBM round trip.
    """
    B, C, H, W = x_nchw.shape
    N = H * W
    c8 = wb.shape[1]
    x_bnc = jnp.transpose(x_nchw, (0, 2, 3, 1)).reshape(B, N, C)
    w_pack, b_pack = pam_pack_params(wb, bb, wc, bc, wd, bd)
    out_bnc = position_attention_bnc(x_bnc, w_pack, b_pack, alpha, c8,
                                     tile_m=tile_m)
    return jnp.transpose(out_bnc.reshape(B, H, W, C), (0, 3, 1, 2))


def _reference(x_nchw, wb, bb, wc, bc, wd, bd, alpha):
    """Pure-JAX f32 reference mirroring the PyTorch forward."""
    B, C, H, W = x_nchw.shape
    N = H * W
    x_nc = jnp.transpose(x_nchw, (0, 2, 3, 1)).reshape(B, N, C)
    fb = x_nc @ wb + bb            # (B, N, C8)
    fc = x_nc @ wc + bc            # (B, N, C8)
    fd = x_nc @ wd + bd            # (B, N, C)
    logits = jnp.einsum("bnk,bmk->bnm", fb, fc)
    attn = jax.nn.softmax(logits, axis=-1)
    fe = jnp.einsum("bnm,bmc->bnc", attn, fd)
    out_nc = alpha[0, 0] * fe + x_nc
    return jnp.transpose(out_nc.reshape(B, H, W, C), (0, 3, 1, 2))


if __name__ == "__main__":
    B, C, H, W = 2, 32, 16, 16          # in_channels=32 -> C/8 = 4, N = 256
    C8 = C // 8

    key = jax.random.PRNGKey(0)
    kx, kwb, kbb, kwc, kbc, kwd, kbd = jax.random.split(key, 7)

    x = jax.random.normal(kx, (B, C, H, W), dtype=jnp.float32)

    # Deterministic synthetic parameters; 1x1 conv weights stored as
    # (C_in, C_out) so each conv is x_nc @ W + b.
    scale = 1.0 / np.sqrt(C)
    wb = jax.random.normal(kwb, (C, C8), dtype=jnp.float32) * scale
    bb = jax.random.normal(kbb, (1, C8), dtype=jnp.float32) * 0.1
    wc = jax.random.normal(kwc, (C, C8), dtype=jnp.float32) * scale
    bc = jax.random.normal(kbc, (1, C8), dtype=jnp.float32) * 0.1
    wd = jax.random.normal(kwd, (C, C), dtype=jnp.float32) * scale
    bd = jax.random.normal(kbd, (1, C), dtype=jnp.float32) * 0.1
    # Module __init__ sets alpha = 0 (output == x); use a nonzero value so the
    # attention path is actually exercised.
    alpha = jnp.array([[0.5]], dtype=jnp.float32)

    out = position_attention(x, wb, bb, wc, bc, wd, bd, alpha, tile_m=128)
    out = jax.block_until_ready(out)

    ref = _reference(x, wb, bb, wc, bc, wd, bd, alpha)
    # bf16 MXU operands + approx reciprocal => relaxed tolerance vs f32 ref.
    np.testing.assert_allclose(np.asarray(out), np.asarray(ref),
                               rtol=5e-2, atol=7.5e-2)
    print("KERNEL_OK")
</pallas_src>

<mosaic_0001>
module attributes {stable_mosaic.version = 11 : i64} {
  func.func @_pam_kernel(%arg0: i32, %arg1: i32, %arg2: memref<1x256x32xf32, #tpu.memory_space<vmem>>, %arg3: memref<32x40xbf16, #tpu.memory_space<vmem>>, %arg4: memref<1x40xf32, #tpu.memory_space<vmem>>, %arg5: memref<1x1xf32, #tpu.memory_space<smem>>, %arg6: memref<1x128x32xf32, #tpu.memory_space<vmem>>, %arg7: memref<256x40xbf16, #tpu.memory_space<vmem>>) attributes {dimension_semantics = [#tpu.dimension_semantics<parallel>, #tpu.dimension_semantics<arbitrary>], iteration_bounds = array<i64: 2, 2>, scalar_prefetch = 0 : i64, scratch_operands = 1 : i64, tpu.core_type = #tpu.core_type<tc>, window_params = [{transform_indices = @transform_0, window_bounds = array<i64: 1, 256, 32>}, {pipeline_mode = #tpu.pipeline_mode<synchronous>, transform_indices = @transform_1, window_bounds = array<i64: 32, 40>}, {pipeline_mode = #tpu.pipeline_mode<synchronous>, transform_indices = @transform_2, window_bounds = array<i64: 1, 40>}, {transform_indices = @transform_3, window_bounds = array<i64: 1, 1>}, {transform_indices = @transform_4, window_bounds = array<i64: 1, 128, 32>}]} {
    %c0_i32 = arith.constant 0 : i32
    %0 = arith.cmpi eq, %arg1, %c0_i32 : i32
    %1 = arith.extui %0 : i1 to i32
    %c0_i32_0 = arith.constant 0 : i32
    %2 = arith.cmpi ne, %1, %c0_i32_0 : i32
    scf.if %2 {
      %c0_13 = arith.constant 0 : index
      %c0_14 = arith.constant 0 : index
      %c0_15 = arith.constant 0 : index
      %34 = vector.load %arg2[%c0_13, %c0_14, %c0_15] : memref<1x256x32xf32, #tpu.memory_space<vmem>>, vector<1x256x32xf32>
      %35 = vector.shape_cast %34 : vector<1x256x32xf32> to vector<256x32xf32>
      %36 = arith.truncf %35 : vector<256x32xf32> to vector<256x32xbf16>
      %c0_16 = arith.constant 0 : index
      %c0_17 = arith.constant 0 : index
      %37 = vector.load %arg3[%c0_16, %c0_17] : memref<32x40xbf16, #tpu.memory_space<vmem>>, vector<32x40xbf16>
      %cst_18 = arith.constant dense<0.000000e+00> : vector<256x40xf32>
      %38 = tpu.matmul %36, %37, %cst_18 {dimension_numbers = #tpu.dot_dimension_numbers<[1], [0], [0], [1], [0, 0, 1, 1], [], []>} : vector<256x32xbf16>, vector<32x40xbf16>, vector<256x40xf32> -> vector<256x40xf32>
      %c0_19 = arith.constant 0 : index
      %c0_20 = arith.constant 0 : index
      %39 = vector.load %arg4[%c0_19, %c0_20] : memref<1x40xf32, #tpu.memory_space<vmem>>, vector<1x40xf32>
      %40 = vector.broadcast %39 : vector<1x40xf32> to vector<256x40xf32>
      %41 = arith.addf %38, %40 : vector<256x40xf32>
      %42 = arith.truncf %41 : vector<256x40xf32> to vector<256x40xbf16>
      %c0_21 = arith.constant 0 : index
      %c0_22 = arith.constant 0 : index
      %43 = vector.load %arg7[%c0_21, %c0_22] : memref<256x40xbf16, #tpu.memory_space<vmem>>, vector<256x40xbf16>
      tpu.vector_store %arg7[%c0_21, %c0_22], %42 {strides = array<i32>} : memref<256x40xbf16, #tpu.memory_space<vmem>>, vector<256x40xbf16>,
    } else {
    }
    %c128_i32 = arith.constant 128 : i32
    %3 = arith.muli %arg1, %c128_i32 : i32
    %4 = tpu.assume_multiple %3, 128 : i32
    %c0 = arith.constant 0 : index
    %c0_1 = arith.constant 0 : index
    %5 = vector.load %arg7[%c0, %c0_1] : memref<256x40xbf16, #tpu.memory_space<vmem>>, vector<256x40xbf16>
    %6 = arith.index_cast %4 : i32 to index
    %c0_2 = arith.constant 0 : index
    %7 = vector.load %arg7[%6, %c0_2] : memref<256x40xbf16, #tpu.memory_space<vmem>>, vector<128x40xbf16>
    %8 = vector.extract_strided_slice %5 {offsets = [0, 0], sizes = [256, 32], strides = [1, 1]} : vector<256x40xbf16> to vector<256x32xbf16>
    %9 = vector.extract_strided_slice %5 {offsets = [0, 36], sizes = [256, 4], strides = [1, 1]} : vector<256x40xbf16> to vector<256x4xbf16>
    %10 = vector.extract_strided_slice %7 {offsets = [0, 32], sizes = [128, 4], strides = [1, 1]} : vector<128x40xbf16> to vector<128x4xbf16>
    %cst = arith.constant dense<0.000000e+00> : vector<128x256xf32>
    %11 = tpu.matmul %10, %9, %cst {dimension_numbers = #tpu.dot_dimension_numbers<[1], [1], [0], [0], [0, 0, 1, 0], [], []>} : vector<128x4xbf16>, vector<256x4xbf16>, vector<128x256xf32> -> vector<128x256xf32>
    %cst_3 = arith.constant dense<0xFF800000> : vector<128xf32>
    %12 = vector.multi_reduction <maximumf>, %11, %cst_3 [1] : vector<128x256xf32> to vector<128xf32>
    %13 = vector.shape_cast %12 : vector<128xf32> to vector<128x1xf32>
    %14 = vector.broadcast %13 : vector<128x1xf32> to vector<128x256xf32>
    %15 = arith.subf %11, %14 : vector<128x256xf32>
    %16 = math.exp %15 : vector<128x256xf32>
    %cst_4 = arith.constant dense<0.000000e+00> : vector<128xf32>
    %17 = vector.multi_reduction <add>, %16, %cst_4 [1] : vector<128x256xf32> to vector<128xf32>
    %18 = vector.shape_cast %17 : vector<128xf32> to vector<128x1xf32>
    %19 = tpu.reciprocal %18 {approx = true} : vector<128x1xf32> -> vector<128x1xf32>
    %20 = vector.broadcast %19 : vector<128x1xf32> to vector<128x256xf32>
    %21 = arith.mulf %16, %20 : vector<128x256xf32>
    %22 = arith.truncf %21 : vector<128x256xf32> to vector<128x256xbf16>
    %cst_5 = arith.constant dense<0.000000e+00> : vector<128x32xf32>
    %23 = tpu.matmul %22, %8, %cst_5 {dimension_numbers = #tpu.dot_dimension_numbers<[1], [0], [0], [1], [0, 0, 1, 1], [], []>} : vector<128x256xbf16>, vector<256x32xbf16>, vector<128x32xf32> -> vector<128x32xf32>
    %c0_6 = arith.constant 0 : index
    %24 = arith.index_cast %4 : i32 to index
    %c0_7 = arith.constant 0 : index
    %25 = vector.load %arg2[%c0_6, %24, %c0_7] : memref<1x256x32xf32, #tpu.memory_space<vmem>>, vector<1x128x32xf32>
    %26 = vector.shape_cast %25 : vector<1x128x32xf32> to vector<128x32xf32>
    %c0_8 = arith.constant 0 : index
    %c0_9 = arith.constant 0 : index
    %27 = memref.load %arg5[%c0_8, %c0_9] : memref<1x1xf32, #tpu.memory_space<smem>>
    %28 = vector.broadcast %27 : f32 to vector<128x32xf32>
    %29 = arith.mulf %28, %23 : vector<128x32xf32>
    %30 = arith.addf %29, %26 : vector<128x32xf32>
    %c0_10 = arith.constant 0 : index
    %c0_11 = arith.constant 0 : index
    %c0_12 = arith.constant 0 : index
    %31 = vector.load %arg6[%c0_10, %c0_11, %c0_12] : memref<1x128x32xf32, #tpu.memory_space<vmem>>, vector<1x128x32xf32>
    %32 = vector.shape_cast %31 : vector<1x128x32xf32> to vector<128x32xf32>
    %33 = vector.shape_cast %30 : vector<128x32xf32> to vector<1x128x32xf32>
    tpu.vector_store %arg6[%c0_10, %c0_11, %c0_12], %33 {strides = array<i32>} : memref<1x128x32xf32, #tpu.memory_space<vmem>>, vector<1x128x32xf32>,
    return
  }
  func.func @transform_0(%arg0: i32, %arg1: i32) -> (i32, i32, i32) {
    %c0_i32 = arith.constant 0 : i32
    %c0_i32_0 = arith.constant 0 : i32
    %c0_i32_1 = arith.constant 0 : i32
    return %arg0, %c0_i32, %c0_i32_0 : i32, i32, i32
  }
  func.func @transform_1(%arg0: i32, %arg1: i32) -> (i32, i32) {
    %c0_i32 = arith.constant 0 : i32
    %c0_i32_0 = arith.constant 0 : i32
    %c0_i32_1 = arith.constant 0 : i32
    return %c0_i32, %c0_i32_0 : i32, i32
  }
  func.func @transform_2(%arg0: i32, %arg1: i32) -> (i32, i32) {
    %c0_i32 = arith.constant 0 : i32
    %c0_i32_0 = arith.constant 0 : i32
    %c0_i32_1 = arith.constant 0 : i32
    return %c0_i32, %c0_i32_0 : i32, i32
  }
  func.func @transform_3(%arg0: i32, %arg1: i32) -> (i32, i32) {
    %c0_i32 = arith.constant 0 : i32
    %c0_i32_0 = arith.constant 0 : i32
    %c0_i32_1 = arith.constant 0 : i32
    return %c0_i32, %c0_i32_0 : i32, i32
  }
  func.func @transform_4(%arg0: i32, %arg1: i32) -> (i32, i32, i32) {
    %c0_i32 = arith.constant 0 : i32
    %c0_i32_0 = arith.constant 0 : i32
    return %arg0, %arg1, %c0_i32 : i32, i32, i32
  }
}

</mosaic_0001>

<llo_original>
// kernel: tpu_custom_call.1
$region0: #{tpu_custom_call.1}
  #allocation0 [shape = 'u32[]', space=smem, size = 0x4, offset = 0x4, fixed_abs, tag = 'smem constant byte address 0x4 - core index']
  #allocation1 [shape = 'u32[144,128]{1,0:T(1,128)}', space=vmem, size = 0x12000, scoped, tag = 'internal scratch']
  #allocation2 [shape = 'bf16[256,40]{1,0:T(8,128)(2,1)}', space=vmem, size = 0x10000, scoped, tag = 'scratch operand']
  #allocation3 [shape = 'f32[1,1]{1,0:T(1,128)S(6)}', space=smem, size = 0x200, scoped, tag = 'scoped memory for tpu_custom_call.1']
  %s0 = inlined_call_operand.vmem [shape: f32[2,256,32], index: 0, kind: input, shape index: {}]
  %s1 = inlined_call_operand.vmem [shape: bf16[32,40], index: 1, kind: input, shape index: {}]
  %s2 = inlined_call_operand.vmem [shape: f32[1,40], index: 2, kind: input, shape index: {}]
  %s3 = inlined_call_operand.<no memory space> [shape: f32[1,1], index: 3, kind: input, shape index: {}]
  %s4 = inlined_call_operand.vmem [shape: f32[2,256,32], index: 4, kind: output, shape index: {}]
  %s5 = sld [smem:[#allocation0]]
  $region53: #{tpu_custom_call.1} parent=0
    _
  %s7 = ssub.s32 1, %s5
  %s8 = scalar_select 0, %s7, %s5
  %9 = sst [smem:[#allocation3]] %s3
  loop: start=0, step=1, limit=6
  $region2: #{tpu_custom_call.1} parent=0 // loop_pre_header
    _
  $region3: #{tpu_custom_call.1} parent=0 // loop_header
    %s11 = sphi 0, %s15
    %p12 = scmp.ge.s32.totalorder %s11, 6
    %s18 = sphi 0, %s30
    %s19 = sphi 0, %s26
    %s20 = sphi 0, %s18
    %s21 = sphi 0, %s19
    %s22 = sphi 0, %s20
    %s23 = sphi 0, %s21
    %s33 = sphi 0, %s35
    %s36 = sphi 0, %s33
    %s37 = sphi 0, %s36
    %s53 = sphi 0, %s37
    %s57 = sphi 0, %s57
    %s59 = sphi 0, %s57
    %s60 = sphi 0, %s59
    %s74 = sphi 0, %s60
    %s78 = sphi 0, %s78
    %s80 = sphi 0, %s78
    %s81 = sphi 0, %s80
    %s95 = sphi 0, %s81
    %s99 = sphi 0, %s99
    %s101 = sphi 0, %s99
    %s102 = sphi 0, %s101
    %s116 = sphi 0, %s102
    %s124 = sphi 0, %s126
    %s127 = sphi 0, %s124
    %s128 = sphi 0, %s127
    %s144 = sphi 0, %s128
  $region4: #{tpu_custom_call.1} parent=0 // loop_header_branch
    %14 = sbr.rel (%p12) target = $region8
  $region5: #{tpu_custom_call.1} parent=0 // loop_body
    %s16 = ssub.s32 %s11, 1
    %s17 = ssub.s32 %s11, 2
    %s24 = sadd.s32 1, %s19
    %p25 = scmp.ge.s32.totalorder %s24, 2
    %s26 = scalar_select %p25, 0, %s24
    %s27 = sadd.s32 1, %s18
    %s28 = scalar_select %p25, %s27, %s18
    %p29 = scmp.ge.s32.totalorder %s28, 2
    %s30 = scalar_select %p29, 0, %s28
    %s31 = ssub.s32 %s18, %s30
    %p32 = scmp.eq.s32.totalorder %s31, 0
    %s34 = sadd.s32 %s33, 1
    %s35 = scalar_select %p32, %s33, %s34
    %p38 = pneg %p32
    %p39 = scmp.eq.s32.totalorder %s11, 3
    %p40 = por %p38, %p39
    %p41 = scmp.ne.s32.totalorder %s33, %s36
    %p42 = scmp.eq.s32.totalorder %s11, 0
    %p43 = por %p41, %p42
    %p44 = scmp.ne.s32.totalorder %s33, %s36
    %p45 = scmp.eq.s32.totalorder %s16, 3
    %p46 = por %p44, %p45
    %p47 = scmp.ne.s32.totalorder %s36, %s37
    %p48 = scmp.eq.s32.totalorder %s16, 0
    %p49 = por %p47, %p48
    %p50 = scmp.ne.s32.totalorder %s36, %s37
    %p51 = scmp.eq.s32.totalorder %s17, 3
    %p52 = por %p50, %p51
    %p54 = scmp.ne.s32.totalorder %s37, %s53
    %p55 = scmp.eq.s32.totalorder %s17, 0
    %p56 = por %p54, %p55
    %s58 = sadd.s32 %s57, 1
    %p61 = scmp.eq.s32.totalorder %s11, 3
    %p62 = scmp.ne.s32.totalorder %s57, %s59
    %p63 = scmp.eq.s32.totalorder %s11, 0
    %p64 = por %p62, %p63
    %p65 = scmp.ne.s32.totalorder %s57, %s59
    %p66 = scmp.eq.s32.totalorder %s16, 3
    %p67 = por %p65, %p66
    %p68 = scmp.ne.s32.totalorder %s59, %s60
    %p69 = scmp.eq.s32.totalorder %s16, 0
    %p70 = por %p68, %p69
    %p71 = scmp.ne.s32.totalorder %s59, %s60
    %p72 = scmp.eq.s32.totalorder %s17, 3
    %p73 = por %p71, %p72
    %p75 = scmp.ne.s32.totalorder %s60, %s74
    %p76 = scmp.eq.s32.totalorder %s17, 0
    %p77 = por %p75, %p76
    %s79 = sadd.s32 %s78, 1
    %p82 = scmp.eq.s32.totalorder %s11, 3
    %p83 = scmp.ne.s32.totalorder %s78, %s80
    %p84 = scmp.eq.s32.totalorder %s11, 0
    %p85 = por %p83, %p84
    %p86 = scmp.ne.s32.totalorder %s78, %s80
    %p87 = scmp.eq.s32.totalorder %s16, 3
    %p88 = por %p86, %p87
    %p89 = scmp.ne.s32.totalorder %s80, %s81
    %p90 = scmp.eq.s32.totalorder %s16, 0
    %p91 = por %p89, %p90
    %p92 = scmp.ne.s32.totalorder %s80, %s81
    %p93 = scmp.eq.s32.totalorder %s17, 3
    %p94 = por %p92, %p93
    %p96 = scmp.ne.s32.totalorder %s81, %s95
    %p97 = scmp.eq.s32.totalorder %s17, 0
    %p98 = por %p96, %p97
    %s100 = sadd.s32 %s99, 1
    %p103 = scmp.eq.s32.totalorder %s11, 3
    %p104 = scmp.ne.s32.totalorder %s99, %s101
    %p105 = scmp.eq.s32.totalorder %s11, 0
    %p106 = por %p104, %p105
    %p107 = scmp.ne.s32.totalorder %s99, %s101
    %p108 = scmp.eq.s32.totalorder %s16, 3
    %p109 = por %p107, %p108
    %p110 = scmp.ne.s32.totalorder %s101, %s102
    %p111 = scmp.eq.s32.totalorder %s16, 0
    %p112 = por %p110, %p111
    %p113 = scmp.ne.s32.totalorder %s101, %s102
    %p114 = scmp.eq.s32.totalorder %s17, 3
    %p115 = por %p113, %p114
    %p117 = scmp.ne.s32.totalorder %s102, %s116
    %p118 = scmp.eq.s32.totalorder %s17, 0
    %p119 = por %p117, %p118
    %s120 = ssub.s32 %s18, %s30
    %s121 = ssub.s32 %s19, %s26
    %s122 = sor.u32 %s120, %s121
    %p123 = scmp.eq.s32.totalorder %s122, 0
    %s125 = sadd.s32 %s124, 1
    %s126 = scalar_select %p123, %s124, %s125
    %p129 = pneg %p123
    %p130 = scmp.eq.s32.totalorder %s11, 3
    %p131 = por %p129, %p130
    %p132 = scmp.ne.s32.totalorder %s124, %s127
    %p133 = scmp.eq.s32.totalorder %s11, 0
    %p134 = por %p132, %p133
    %p135 = scmp.ne.s32.totalorder %s124, %s127
    %p136 = scmp.eq.s32.totalorder %s16, 3
    %p137 = por %p135, %p136
    %p138 = scmp.ne.s32.totalorder %s127, %s128
    %p139 = scmp.eq.s32.totalorder %s16, 0
    %p140 = por %p138, %p139
    %p141 = scmp.ne.s32.totalorder %s127, %s128
    %p142 = scmp.eq.s32.totalorder %s17, 3
    %p143 = por %p141, %p142
    %p145 = scmp.ne.s32.totalorder %s128, %s144
    %p146 = scmp.eq.s32.totalorder %s17, 0
    %p147 = por %p145, %p146
    %p148 = scmp.le.s32.totalorder 1, %s11
    %p149 = scmp.lt.s32.totalorder %s11, 5
    %p150 = pnand %p148, %p149
    %p151 = pneg %p150
    // Predicated region
    $region9: #{tpu_custom_call.1} parent=5 // pred_check
      _
    $region10: #{tpu_custom_call.1} parent=5 // pred_check_branch
      %153 = sbr.rel (%p150) target = $region12
    $region11: #{tpu_custom_call.1} parent=5 // pred_region
      %s154 = ssub.s32 %s11, 1
      // Predicated region
      $region13: #{tpu_custom_call.1} parent=11 // pred_check
        %p155 = pneg %p70
      $region14: #{tpu_custom_call.1} parent=11 // pred_check_branch
        %157 = sbr.rel (%p155) target = $region16
      $region15: #{tpu_custom_call.1} parent=11 // pred_region
        _
      $region16: #{tpu_custom_call.1} parent=11 // pred_fallthru
        _
      // Predicated region
      $region17: #{tpu_custom_call.1} parent=11 // pred_check
        %p158 = pneg %p91
      $region18: #{tpu_custom_call.1} parent=11 // pred_check_branch
        %160 = sbr.rel (%p158) target = $region20
      $region19: #{tpu_custom_call.1} parent=11 // pred_region
        _
      $region20: #{tpu_custom_call.1} parent=11 // pred_fallthru
        _
      // Predicated region
      $region21: #{tpu_custom_call.1} parent=11 // pred_check
        %p161 = pneg %p112
      $region22: #{tpu_custom_call.1} parent=11 // pred_check_branch
        %163 = sbr.rel (%p161) target = $region24
      $region23: #{tpu_custom_call.1} parent=11 // pred_region
        _
      $region24: #{tpu_custom_call.1} parent=11 // pred_fallthru
        _
    $region12: #{tpu_custom_call.1} parent=5 // pred_fallthru
      _
    %p164 = scmp.lt.s32.totalorder %s11, 4
    // Predicated region
    $region25: #{tpu_custom_call.1} parent=5 // pred_check
      %p165 = pneg %p164
    $region26: #{tpu_custom_call.1} parent=5 // pred_check_branch
      %167 = sbr.rel (%p165) target = $region28
    $region27: #{tpu_custom_call.1} parent=5 // pred_region
      // Predicated region
      $region29: #{tpu_custom_call.1} parent=27 // pred_check
        %p168 = pneg %p43
      $region30: #{tpu_custom_call.1} parent=27 // pred_check_branch
        %170 = sbr.rel (%p168) target = $region32
      $region31: #{tpu_custom_call.1} parent=27 // pred_region
        %p171 = scmp.lt.s32.totalorder %s18, 1
        %s172 = scalar_select %p171, %s18, 1
        %s173 = smul.addr %s172, 32
        %s174 = smul.addr %s173, 8
        %s175 = scalar_lea.vmem %s0, %s174
      $region32: #{tpu_custom_call.1} parent=27 // pred_fallthru
        _
    $region28: #{tpu_custom_call.1} parent=5 // pred_fallthru
      _
    %p176 = scmp.le.s32.totalorder 1, %s11
    %p177 = scmp.lt.s32.totalorder %s11, 5
    %p178 = pnand %p176, %p177
    %p179 = pneg %p178
    // Predicated region
    $region33: #{tpu_custom_call.1} parent=5 // pred_check
      _
    $region34: #{tpu_custom_call.1} parent=5 // pred_check_branch
      %181 = sbr.rel (%p178) target = $region36
    $region35: #{tpu_custom_call.1} parent=5 // pred_region
      %s182 = ssub.s32 %s11, 1
      %p183 = scmp.lt.s32.totalorder %s20, 1
      %s184 = scalar_select %p183, %s20, 1
      %s185 = smul.addr %s184, 32
      %s186 = smul.addr %s185, 8
      %s187 = scalar_lea.vmem %s0, %s186
      %p188 = pneg %p49
      %p189 = pneg %p46
      %p190 = pneg %p70
      %p191 = pneg %p67
      %p192 = pneg %p91
      %p193 = pneg %p88
      %p194 = pneg %p112
      %p195 = pneg %p109
      %p196 = pneg %p140
      %p197 = pneg %p137
      %s198 = smul.u32 16, %s21
      %p199 = scmp.lt.s32.totalorder %s20, 1
      %s200 = scalar_select %p199, %s20, 1
      %p201 = scmp.lt.s32.totalorder %s198, 31
      %s202 = scalar_select %p201, %s198, 31
      %s203 = smul.addr %s200, 32
      %s204 = sadd.s32 %s202, %s203
      %s205 = smul.addr %s204, 8
      %s206 = scalar_lea.vmem %s4, %s205
      %p207 = scmp.lt.s32.totalorder %s20, 1
      %s208 = scalar_select %p207, %s20, 1
      %s209 = smul.addr %s208, 32
      %s210 = smul.addr %s209, 8
      %s211 = scalar_lea.vmem %s0, %s210
      %s212 = smul.u32 16, %s21
      %p213 = scmp.lt.s32.totalorder %s20, 1
      %s214 = scalar_select %p213, %s20, 1
      %p215 = scmp.lt.s32.totalorder %s212, 31
      %s216 = scalar_select %p215, %s212, 31
      %s217 = smul.addr %s214, 32
      %s218 = sadd.s32 %s216, %s217
      %s219 = smul.addr %s218, 8
      %s220 = scalar_lea.vmem %s4, %s219
      %s221 = smul.u32 16, %s21
      %p223 = scmp.eq.s32.totalorder %s21, 0
      // Predicated region
      $region37: #{tpu_custom_call.1} parent=35 // pred_check
        %p224 = pneg %p223
      $region38: #{tpu_custom_call.1} parent=35 // pred_check_branch
        %226 = sbr.rel (%p224) target = $region40
      $region39: #{tpu_custom_call.1} parent=35 // pred_region
        %v227 = vld [vmem:[%s211] sm:$0xff]
        %v228 = vld [vmem:[%s211 + $0x8] sm:$0xff]
        %v229 = vld [vmem:[%s211 + $0x10] sm:$0xff]
        %v230 = vld [vmem:[%s211 + $0x18] sm:$0xff]
        %v231 = vld [vmem:[%s211 + $0x20] sm:$0xff]
        %v232 = vld [vmem:[%s211 + $0x28] sm:$0xff]
        %v233 = vld [vmem:[%s211 + $0x30] sm:$0xff]
        %v234 = vld [vmem:[%s211 + $0x38] sm:$0xff]
        %v235 = vld [vmem:[%s211 + $0x40] sm:$0xff]
        %v236 = vld [vmem:[%s211 + $0x48] sm:$0xff]
        %v237 = vld [vmem:[%s211 + $0x50] sm:$0xff]
        %v238 = vld [vmem:[%s211 + $0x58] sm:$0xff]
        %v239 = vld [vmem:[%s211 + $0x60] sm:$0xff]
        %v240 = vld [vmem:[%s211 + $0x68] sm:$0xff]
        %v241 = vld [vmem:[%s211 + $0x70] sm:$0xff]
        %v242 = vld [vmem:[%s211 + $0x78] sm:$0xff]
        %v243 = vld [vmem:[%s211 + $0x80] sm:$0xff]
        %v244 = vld [vmem:[%s211 + $0x88] sm:$0xff]
        %v245 = vld [vmem:[%s211 + $0x90] sm:$0xff]
        %v246 = vld [vmem:[%s211 + $0x98] sm:$0xff]
        %v247 = vld [vmem:[%s211 + $0xa0] sm:$0xff]
        %v248 = vld [vmem:[%s211 + $0xa8] sm:$0xff]
        %v249 = vld [vmem:[%s211 + $0xb0] sm:$0xff]
        %v250 = vld [vmem:[%s211 + $0xb8] sm:$0xff]
        %v251 = vld [vmem:[%s211 + $0xc0] sm:$0xff]
        %v252 = vld [vmem:[%s211 + $0xc8] sm:$0xff]
        %v253 = vld [vmem:[%s211 + $0xd0] sm:$0xff]
        %v254 = vld [vmem:[%s211 + $0xd8] sm:$0xff]
        %v255 = vld [vmem:[%s211 + $0xe0] sm:$0xff]
        %v256 = vld [vmem:[%s211 + $0xe8] sm:$0xff]
        %v257 = vld [vmem:[%s211 + $0xf0] sm:$0xff]
        %v258 = vld [vmem:[%s211 + $0xf8] sm:$0xff]
        %v259 = vpack.c.bf16 %v228, %v227
        %v260 = vpack.c.bf16 %v230, %v229
        %v261 = vpack.c.bf16 %v232, %v231
        %v262 = vpack.c.bf16 %v234, %v233
        %v263 = vpack.c.bf16 %v236, %v235
        %v264 = vpack.c.bf16 %v238, %v237
        %v265 = vpack.c.bf16 %v240, %v239
        %v266 = vpack.c.bf16 %v242, %v241
        %v267 = vpack.c.bf16 %v244, %v243
        %v268 = vpack.c.bf16 %v246, %v245
        %v269 = vpack.c.bf16 %v248, %v247
        %v270 = vpack.c.bf16 %v250, %v249
        %v271 = vpack.c.bf16 %v252, %v251
        %v272 = vpack.c.bf16 %v254, %v253
        %v273 = vpack.c.bf16 %v256, %v255
        %v274 = vpack.c.bf16 %v258, %v257
        %v275 = vld [vmem:[%s1] sm:$0xf]
        %v276 = vld [vmem:[%s1 + $0x4] sm:$0xf]
        %v277 = vld [vmem:[%s1 + $0x8] sm:$0xf]
        %v278 = vld [vmem:[%s1 + $0xc] sm:$0xf]
        %v279 = vld [vmem:[%s2] sm:$0x1]
        %v281 = vlaneseq
        %v282 = vshrl.u32 %v281, 7
        %v283 = vsub.s32 0, %v282
        %v284 = vrot.slane %v279, %v283
        %v290 = vunpack.c.l.b16 %v275
        %v291 = vunpack.c.l.b16 %v276
        %v292 = vunpack.c.l.b16 %v277
        %v293 = vunpack.c.l.b16 %v278
        %v294 = vpack.c.b16 %v291, %v290
        %v295 = vpack.c.b16 %v293, %v292
        %vm298 = vcmask 261120
        %v300 = vsel %vm298, %v259, 0
        %v303 = vsel %vm298, %v260, 0
        %v306 = vsel %vm298, %v261, 0
        %v309 = vsel %vm298, %v262, 0
        %v312 = vsel %vm298, %v263, 0
        %v315 = vsel %vm298, %v264, 0
        %v318 = vsel %vm298, %v265, 0
        %v321 = vsel %vm298, %v266, 0
        %v324 = vsel %vm298, %v267, 0
        %v327 = vsel %vm298, %v268, 0
        %v330 = vsel %vm298, %v269, 0
        %v333 = vsel %vm298, %v270, 0
        %v336 = vsel %vm298, %v271, 0
        %v339 = vsel %vm298, %v272, 0
        %v342 = vsel %vm298, %v273, 0
        %v345 = vsel %vm298, %v274, 0
        %347 = vmatprep.subr.bf16.mxu0 0
        %348 = vmatpush1.bf16.msra.mxu0 0
        %349 = vmatprep.subr.bf16.mxu0 0
        %350 = vmatpush1.bf16.msra.mxu0 0
        %351 = vmatprep.subr.bf16.mxu0 0
        %352 = vmatpush1.bf16.msra.mxu0 0
        %353 = vmatprep.subr.bf16.mxu0 0
        %354 = vmatpush1.bf16.msra.mxu0 0
        %355 = vmatprep.subr.bf16.mxu0 0
        %356 = vmatpush1.bf16.msra.mxu0 0
        %357 = vmatprep.subr.bf16.mxu0 0
        %358 = vmatpush1.bf16.msra.mxu0 0
        %359 = vmatprep.subr.bf16.mxu0 0
        %360 = vmatpush1.bf16.msra.mxu0 %v295
        %361 = vmatprep.subr.bf16.mxu0 0
        %362 = vmatpush1.bf16.msra.mxu0 %v294
        %363 = vmatprep.subr.bf16.mxu0 0
        %364 = vmatpush2.bf16.msra.mxu0 0
        %365 = vmatprep.subr.bf16.mxu0 0
        %366 = vmatpush2.bf16.msra.mxu0 0
        %367 = vmatprep.subr.bf16.mxu0 0
        %368 = vmatpush2.bf16.msra.mxu0 0
        %369 = vmatprep.subr.bf16.mxu0 0
        %370 = vmatpush2.bf16.msra.mxu0 0
        %371 = vmatprep.subr.bf16.mxu0 0
        %372 = vmatpush2.bf16.msra.mxu0 0
        %373 = vmatprep.subr.bf16.mxu0 0
        %374 = vmatpush2.bf16.msra.mxu0 0
        %375 = vmatprep.subr.bf16.mxu0 0
        %376 = vmatpush2.bf16.msra.mxu0 0
        %377 = vmatprep.subr.bf16.mxu0 0
        %378 = vmatpush2.bf16.msra.mxu0 0
        %379 = vmatprep.mubr.bf16.mxu0 0
        %380 = vmatmul.mubr.bf16.gmra.mxu0 %v300
        %v381 = vpop.f32.mrf.mxu0
        %v382 = vadd.f32 %v284, %v381
        %v383 = vpop.f32.mrf.mxu0
        %v384 = vpop.f32.mrf.mxu0
        %v385 = vadd.f32 %v284, %v384
        %v386 = vpop.f32.mrf.mxu0
        %387 = vmatprep.mubr.bf16.mxu0 0
        %388 = vmatmul.mubr.bf16.gmra.mxu0 %v303
        %v389 = vpop.f32.mrf.mxu0
        %v390 = vadd.f32 %v284, %v389
        %v391 = vpop.f32.mrf.mxu0
        %v392 = vpop.f32.mrf.mxu0
        %v393 = vadd.f32 %v284, %v392
        %v394 = vpop.f32.mrf.mxu0
        %395 = vmatprep.mubr.bf16.mxu0 0
        %396 = vmatmul.mubr.bf16.gmra.mxu0 %v306
        %v397 = vpop.f32.mrf.mxu0
        %v398 = vadd.f32 %v284, %v397
        %v399 = vpop.f32.mrf.mxu0
        %v400 = vpop.f32.mrf.mxu0
        %v401 = vadd.f32 %v284, %v400
        %v402 = vpop.f32.mrf.mxu0
        %403 = vmatprep.mubr.bf16.mxu0 0
        %404 = vmatmul.mubr.bf16.gmra.mxu0 %v309
        %v405 = vpop.f32.mrf.mxu0
        %v406 = vadd.f32 %v284, %v405
        %v407 = vpop.f32.mrf.mxu0
        %v408 = vpop.f32.mrf.mxu0
        %v409 = vadd.f32 %v284, %v408
        %v410 = vpop.f32.mrf.mxu0
        %411 = vmatprep.mubr.bf16.mxu0 0
        %412 = vmatmul.mubr.bf16.gmra.mxu0 %v312
        %v413 = vpop.f32.mrf.mxu0
        %v414 = vadd.f32 %v284, %v413
        %v415 = vpop.f32.mrf.mxu0
        %v416 = vpop.f32.mrf.mxu0
        %v417 = vadd.f32 %v284, %v416
        %v418 = vpop.f32.mrf.mxu0
        %419 = vmatprep.mubr.bf16.mxu0 0
        %420 = vmatmul.mubr.bf16.gmra.mxu0 %v315
        %v421 = vpop.f32.mrf.mxu0
        %v422 = vadd.f32 %v284, %v421
        %v423 = vpop.f32.mrf.mxu0
        %v424 = vpop.f32.mrf.mxu0
        %v425 = vadd.f32 %v284, %v424
        %v426 = vpop.f32.mrf.mxu0
        %427 = vmatprep.mubr.bf16.mxu0 0
        %428 = vmatmul.mubr.bf16.gmra.mxu0 %v318
        %v429 = vpop.f32.mrf.mxu0
        %v430 = vadd.f32 %v284, %v429
        %v431 = vpop.f32.mrf.mxu0
        %v432 = vpop.f32.mrf.mxu0
        %v433 = vadd.f32 %v284, %v432
        %v434 = vpop.f32.mrf.mxu0
        %435 = vmatprep.mubr.bf16.mxu0 0
        %436 = vmatmul.mubr.bf16.gmra.mxu0 %v321
        %v437 = vpop.f32.mrf.mxu0
        %v438 = vadd.f32 %v284, %v437
        %v439 = vpop.f32.mrf.mxu0
        %v440 = vpop.f32.mrf.mxu0
        %v441 = vadd.f32 %v284, %v440
        %v442 = vpop.f32.mrf.mxu0
        %443 = vmatprep.mubr.bf16.mxu0 0
        %444 = vmatmul.mubr.bf16.gmra.mxu0 %v324
        %v445 = vpop.f32.mrf.mxu0
        %v446 = vadd.f32 %v284, %v445
        %v447 = vpop.f32.mrf.mxu0
        %v448 = vpop.f32.mrf.mxu0
        %v449 = vadd.f32 %v284, %v448
        %v450 = vpop.f32.mrf.mxu0
        %451 = vmatprep.mubr.bf16.mxu0 0
        %452 = vmatmul.mubr.bf16.gmra.mxu0 %v327
        %v453 = vpop.f32.mrf.mxu0
        %v454 = vadd.f32 %v284, %v453
        %v455 = vpop.f32.mrf.mxu0
        %v456 = vpop.f32.mrf.mxu0
        %v457 = vadd.f32 %v284, %v456
        %v458 = vpop.f32.mrf.mxu0
        %459 = vmatprep.mubr.bf16.mxu0 0
        %460 = vmatmul.mubr.bf16.gmra.mxu0 %v330
        %v461 = vpop.f32.mrf.mxu0
        %v462 = vadd.f32 %v284, %v461
        %v463 = vpop.f32.mrf.mxu0
        %v464 = vpop.f32.mrf.mxu0
        %v465 = vadd.f32 %v284, %v464
        %v466 = vpop.f32.mrf.mxu0
        %467 = vmatprep.mubr.bf16.mxu0 0
        %468 = vmatmul.mubr.bf16.gmra.mxu0 %v333
        %v469 = vpop.f32.mrf.mxu0
        %v470 = vadd.f32 %v284, %v469
        %v471 = vpop.f32.mrf.mxu0
        %v472 = vpop.f32.mrf.mxu0
        %v473 = vadd.f32 %v284, %v472
        %v474 = vpop.f32.mrf.mxu0
        %475 = vmatprep.mubr.bf16.mxu0 0
        %476 = vmatmul.mubr.bf16.gmra.mxu0 %v336
        %v477 = vpop.f32.mrf.mxu0
        %v478 = vadd.f32 %v284, %v477
        %v479 = vpop.f32.mrf.mxu0
        %v480 = vpop.f32.mrf.mxu0
        %v481 = vadd.f32 %v284, %v480
        %v482 = vpop.f32.mrf.mxu0
        %483 = vmatprep.mubr.bf16.mxu0 0
        %484 = vmatmul.mubr.bf16.gmra.mxu0 %v339
        %v485 = vpop.f32.mrf.mxu0
        %v486 = vadd.f32 %v284, %v485
        %v487 = vpop.f32.mrf.mxu0
        %v488 = vpop.f32.mrf.mxu0
        %v489 = vadd.f32 %v284, %v488
        %v490 = vpop.f32.mrf.mxu0
        %491 = vmatprep.mubr.bf16.mxu0 0
        %492 = vmatmul.mubr.bf16.gmra.mxu0 %v342
        %v493 = vpop.f32.mrf.mxu0
        %v494 = vadd.f32 %v284, %v493
        %v495 = vpop.f32.mrf.mxu0
        %v496 = vpop.f32.mrf.mxu0
        %v497 = vadd.f32 %v284, %v496
        %v498 = vpop.f32.mrf.mxu0
        %499 = vmatprep.mubr.bf16.mxu0 0
        %500 = vmatmul.mubr.bf16.gmra.mxu0 %v345
        %v501 = vpop.f32.mrf.mxu0
        %v502 = vadd.f32 %v284, %v501
        %v503 = vpop.f32.mrf.mxu0
        %v504 = vpop.f32.mrf.mxu0
        %v505 = vadd.f32 %v284, %v504
        %v506 = vpop.f32.mrf.mxu0
        %507 = vdwg.mxu0
        %v508 = vpack.c.bf16 %v385, %v382
        %v509 = vpack.c.bf16 %v393, %v390
        %v510 = vpack.c.bf16 %v401, %v398
        %v511 = vpack.c.bf16 %v409, %v406
        %v512 = vpack.c.bf16 %v417, %v414
        %v513 = vpack.c.bf16 %v425, %v422
        %v514 = vpack.c.bf16 %v433, %v430
        %v515 = vpack.c.bf16 %v441, %v438
        %v516 = vpack.c.bf16 %v449, %v446
        %v517 = vpack.c.bf16 %v457, %v454
        %v518 = vpack.c.bf16 %v465, %v462
        %v519 = vpack.c.bf16 %v473, %v470
        %v520 = vpack.c.bf16 %v481, %v478
        %v521 = vpack.c.bf16 %v489, %v486
        %v522 = vpack.c.bf16 %v497, %v494
        %v523 = vpack.c.bf16 %v505, %v502
        %v540 = vunpack.c.l.b16 %v508
        %v541 = vunpack.c.h.b16 %v508
        %v542 = vunpack.c.l.b16 %v509
        %v543 = vunpack.c.h.b16 %v509
        %v544 = vunpack.c.l.b16 %v510
        %v545 = vunpack.c.h.b16 %v510
        %v546 = vunpack.c.l.b16 %v511
        %v547 = vunpack.c.h.b16 %v511
        %v548 = vunpack.c.l.b16 %v512
        %v549 = vunpack.c.h.b16 %v512
        %v550 = vunpack.c.l.b16 %v513
        %v551 = vunpack.c.h.b16 %v513
        %v552 = vunpack.c.l.b16 %v514
        %v553 = vunpack.c.h.b16 %v514
        %v554 = vunpack.c.l.b16 %v515
        %v555 = vunpack.c.h.b16 %v515
        %v556 = vunpack.c.l.b16 %v516
        %v557 = vunpack.c.h.b16 %v516
        %v558 = vunpack.c.l.b16 %v517
        %v559 = vunpack.c.h.b16 %v517
        %v560 = vunpack.c.l.b16 %v518
        %v561 = vunpack.c.h.b16 %v518
        %v562 = vunpack.c.l.b16 %v519
        %v563 = vunpack.c.h.b16 %v519
        %v564 = vunpack.c.l.b16 %v520
        %v565 = vunpack.c.h.b16 %v520
        %v566 = vunpack.c.l.b16 %v521
        %v567 = vunpack.c.h.b16 %v521
        %v568 = vunpack.c.l.b16 %v522
        %v569 = vunpack.c.h.b16 %v522
        %v570 = vunpack.c.l.b16 %v523
        %v571 = vunpack.c.h.b16 %v523
        %v572 = vpack.c.b16 %v540, %v540
        %v573 = vpack.c.b16 %v541, %v541
        %v574 = vpack.c.b16 %v542, %v542
        %v575 = vpack.c.b16 %v543, %v543
        %v576 = vpack.c.b16 %v544, %v544
        %v577 = vpack.c.b16 %v545, %v545
        %v578 = vpack.c.b16 %v546, %v546
        %v579 = vpack.c.b16 %v547, %v547
        %v580 = vpack.c.b16 %v548, %v548
        %v581 = vpack.c.b16 %v549, %v549
        %v582 = vpack.c.b16 %v550, %v550
        %v583 = vpack.c.b16 %v551, %v551
        %v584 = vpack.c.b16 %v552, %v552
        %v585 = vpack.c.b16 %v553, %v553
        %v586 = vpack.c.b16 %v554, %v554
        %v587 = vpack.c.b16 %v555, %v555
        %v588 = vpack.c.b16 %v556, %v556
        %v589 = vpack.c.b16 %v557, %v557
        %v590 = vpack.c.b16 %v558, %v558
        %v591 = vpack.c.b16 %v559, %v559
        %v592 = vpack.c.b16 %v560, %v560
        %v593 = vpack.c.b16 %v561, %v561
        %v594 = vpack.c.b16 %v562, %v562
        %v595 = vpack.c.b16 %v563, %v563
        %v596 = vpack.c.b16 %v564, %v564
        %v597 = vpack.c.b16 %v565, %v565
        %v598 = vpack.c.b16 %v566, %v566
        %v599 = vpack.c.b16 %v567, %v567
        %v600 = vpack.c.b16 %v568, %v568
        %v601 = vpack.c.b16 %v569, %v569
        %v602 = vpack.c.b16 %v570, %v570
        %v603 = vpack.c.b16 %v571, %v571
        %vm636 = vcmask 322560
        %637 = vst.msk [vmem:[#allocation2] sm:$0xf] %vm636, %v572
        %638 = vst.msk [vmem:[#allocation2 + $0x4] sm:$0xf] %vm636, %v573
        %639 = vst.msk [vmem:[#allocation2 + $0x8] sm:$0xf] %vm636, %v574
        %640 = vst.msk [vmem:[#allocation2 + $0xc] sm:$0xf] %vm636, %v575
        %641 = vst.msk [vmem:[#allocation2 + $0x10] sm:$0xf] %vm636, %v576
        %642 = vst.msk [vmem:[#allocation2 + $0x14] sm:$0xf] %vm636, %v577
        %643 = vst.msk [vmem:[#allocation2 + $0x18] sm:$0xf] %vm636, %v578
        %644 = vst.msk [vmem:[#allocation2 + $0x1c] sm:$0xf] %vm636, %v579
        %645 = vst.msk [vmem:[#allocation2 + $0x20] sm:$0xf] %vm636, %v580
        %646 = vst.msk [vmem:[#allocation2 + $0x24] sm:$0xf] %vm636, %v581
        %647 = vst.msk [vmem:[#allocation2 + $0x28] sm:$0xf] %vm636, %v582
        %648 = vst.msk [vmem:[#allocation2 + $0x2c] sm:$0xf] %vm636, %v583
        %649 = vst.msk [vmem:[#allocation2 + $0x30] sm:$0xf] %vm636, %v584
        %650 = vst.msk [vmem:[#allocation2 + $0x34] sm:$0xf] %vm636, %v585
        %651 = vst.msk [vmem:[#allocation2 + $0x38] sm:$0xf] %vm636, %v586
        %652 = vst.msk [vmem:[#allocation2 + $0x3c] sm:$0xf] %vm636, %v587
        %653 = vst.msk [vmem:[#allocation2 + $0x40] sm:$0xf] %vm636, %v588
        %654 = vst.msk [vmem:[#allocation2 + $0x44] sm:$0xf] %vm636, %v589
        %655 = vst.msk [vmem:[#allocation2 + $0x48] sm:$0xf] %vm636, %v590
        %656 = vst.msk [vmem:[#allocation2 + $0x4c] sm:$0xf] %vm636, %v591
        %657 = vst.msk [vmem:[#allocation2 + $0x50] sm:$0xf] %vm636, %v592
        %658 = vst.msk [vmem:[#allocation2 + $0x54] sm:$0xf] %vm636, %v593
        %659 = vst.msk [vmem:[#allocation2 + $0x58] sm:$0xf] %vm636, %v594
        %660 = vst.msk [vmem:[#allocation2 + $0x5c] sm:$0xf] %vm636, %v595
        %661 = vst.msk [vmem:[#allocation2 + $0x60] sm:$0xf] %vm636, %v596
        %662 = vst.msk [vmem:[#allocation2 + $0x64] sm:$0xf] %vm636, %v597
        %663 = vst.msk [vmem:[#allocation2 + $0x68] sm:$0xf] %vm636, %v598
        %664 = vst.msk [vmem:[#allocation2 + $0x6c] sm:$0xf] %vm636, %v599
        %665 = vst.msk [vmem:[#allocation2 + $0x70] sm:$0xf] %vm636, %v600
        %666 = vst.msk [vmem:[#allocation2 + $0x74] sm:$0xf] %vm636, %v601
        %667 = vst.msk [vmem:[#allocation2 + $0x78] sm:$0xf] %vm636, %v602
        %668 = vst.msk [vmem:[#allocation2 + $0x7c] sm:$0xf] %vm636, %v603
      $region40: #{tpu_custom_call.1} parent=35 // pred_fallthru
        _
      %s669 = smul.u32 %s21, 128
      %v670 = vld [vmem:[#allocation2] sm:$0xf]
      %v671 = vld [vmem:[#allocation2 + $0x4] sm:$0xf]
      %v672 = vld [vmem:[#allocation2 + $0x8] sm:$0xf]
      %v673 = vld [vmem:[#allocation2 + $0xc] sm:$0xf]
      %v674 = vld [vmem:[#allocation2 + $0x10] sm:$0xf]
      %v675 = vld [vmem:[#allocation2 + $0x14] sm:$0xf]
      %v676 = vld [vmem:[#allocation2 + $0x18] sm:$0xf]
      %v677 = vld [vmem:[#allocation2 + $0x1c] sm:$0xf]
      %v678 = vld [vmem:[#allocation2 + $0x20] sm:$0xf]
      %v679 = vld [vmem:[#allocation2 + $0x24] sm:$0xf]
      %v680 = vld [vmem:[#allocation2 + $0x28] sm:$0xf]
      %v681 = vld [vmem:[#allocation2 + $0x2c] sm:$0xf]
      %v682 = vld [vmem:[#allocation2 + $0x30] sm:$0xf]
      %v683 = vld [vmem:[#allocation2 + $0x34] sm:$0xf]
      %v684 = vld [vmem:[#allocation2 + $0x38] sm:$0xf]
      %v685 = vld [vmem:[#allocation2 + $0x3c] sm:$0xf]
      %v686 = vld [vmem:[#allocation2 + $0x40] sm:$0xf]
      %v687 = vld [vmem:[#allocation2 + $0x44] sm:$0xf]
      %v688 = vld [vmem:[#allocation2 + $0x48] sm:$0xf]
      %v689 = vld [vmem:[#allocation2 + $0x4c] sm:$0xf]
      %v690 = vld [vmem:[#allocation2 + $0x50] sm:$0xf]
      %v691 = vld [vmem:[#allocation2 + $0x54] sm:$0xf]
      %v692 = vld [vmem:[#allocation2 + $0x58] sm:$0xf]
      %v693 = vld [vmem:[#allocation2 + $0x5c] sm:$0xf]
      %v694 = vld [vmem:[#allocation2 + $0x60] sm:$0xf]
      %v695 = vld [vmem:[#allocation2 + $0x64] sm:$0xf]
      %v696 = vld [vmem:[#allocation2 + $0x68] sm:$0xf]
      %v697 = vld [vmem:[#allocation2 + $0x6c] sm:$0xf]
      %v698 = vld [vmem:[#allocation2 + $0x70] sm:$0xf]
      %v699 = vld [vmem:[#allocation2 + $0x74] sm:$0xf]
      %v700 = vld [vmem:[#allocation2 + $0x78] sm:$0xf]
      %v701 = vld [vmem:[#allocation2 + $0x7c] sm:$0xf]
      %s702 = sshra.s32 %s669, 3
      %s703 = sand.u32 %s669, 7
      %s704 = smul.addr %s702, 4
      %s705 = scalar_lea.vmem [#allocation2], %s704
      %v706 = vld [vmem:[%s705] sm:$0xf]
      %v707 = vld [vmem:[%s705 + $0x4] sm:$0xf]
      %v708 = vld [vmem:[%s705 + $0x8] sm:$0xf]
      %v709 = vld [vmem:[%s705 + $0xc] sm:$0xf]
      %v710 = vld [vmem:[%s705 + $0x10] sm:$0xf]
      %v711 = vld [vmem:[%s705 + $0x14] sm:$0xf]
      %v712 = vld [vmem:[%s705 + $0x18] sm:$0xf]
      %v713 = vld [vmem:[%s705 + $0x1c] sm:$0xf]
      %v714 = vld [vmem:[%s705 + $0x20] sm:$0xf]
      %v715 = vld [vmem:[%s705 + $0x24] sm:$0xf]
      %v716 = vld [vmem:[%s705 + $0x28] sm:$0xf]
      %v717 = vld [vmem:[%s705 + $0x2c] sm:$0xf]
      %v718 = vld [vmem:[%s705 + $0x30] sm:$0xf]
      %v719 = vld [vmem:[%s705 + $0x34] sm:$0xf]
      %v720 = vld [vmem:[%s705 + $0x38] sm:$0xf]
      %v721 = vld [vmem:[%s705 + $0x3c] sm:$0xf]
      %v738 = vunpack.c.l.b16 %v706
      %v739 = vunpack.c.l.b16 %v707
      %v740 = vunpack.c.l.b16 %v708
      %v741 = vunpack.c.l.b16 %v709
      %v742 = vunpack.c.l.b16 %v710
      %v743 = vunpack.c.l.b16 %v711
      %v744 = vunpack.c.l.b16 %v712
      %v745 = vunpack.c.l.b16 %v713
      %v746 = vunpack.c.l.b16 %v714
      %v747 = vunpack.c.l.b16 %v715
      %v748 = vunpack.c.l.b16 %v716
      %v749 = vunpack.c.l.b16 %v717
      %v750 = vunpack.c.l.b16 %v718
      %v751 = vunpack.c.l.b16 %v719
      %v752 = vunpack.c.l.b16 %v720
      %v753 = vunpack.c.l.b16 %v721
      %v754 = vpack.c.b16 %v739, %v738
      %v755 = vpack.c.b16 %v741, %v740
      %v756 = vpack.c.b16 %v743, %v742
      %v757 = vpack.c.b16 %v745, %v744
      %v758 = vpack.c.b16 %v747, %v746
      %v759 = vpack.c.b16 %v749, %v748
      %v760 = vpack.c.b16 %v751, %v750
      %v761 = vpack.c.b16 %v753, %v752
      %762 = vrot.lane.b32.xlu0 %v754, 96
      %v763 = vpop.permute.xlu0 %762
      %764 = vrot.lane.b32.xlu0 %v755, 96
      %v765 = vpop.permute.xlu0 %764
      %766 = vrot.lane.b32.xlu0 %v756, 96
      %v767 = vpop.permute.xlu0 %766
      %768 = vrot.lane.b32.xlu0 %v757, 96
      %v769 = vpop.permute.xlu0 %768
      %770 = vrot.lane.b32.xlu0 %v758, 96
      %v771 = vpop.permute.xlu0 %770
      %772 = vrot.lane.b32.xlu0 %v759, 96
      %v773 = vpop.permute.xlu0 %772
      %774 = vrot.lane.b32.xlu0 %v760, 96
      %v775 = vpop.permute.xlu0 %774
      %776 = vrot.lane.b32.xlu0 %v761, 96
      %v777 = vpop.permute.xlu0 %776
      %v810 = vunpack.c.l.b16 %v670
      %v811 = vunpack.c.l.b16 %v671
      %v812 = vunpack.c.l.b16 %v672
      %v813 = vunpack.c.l.b16 %v673
      %v814 = vunpack.c.l.b16 %v674
      %v815 = vunpack.c.l.b16 %v675
      %v816 = vunpack.c.l.b16 %v676
      %v817 = vunpack.c.l.b16 %v677
      %v818 = vunpack.c.l.b16 %v678
      %v819 = vunpack.c.l.b16 %v679
      %v820 = vunpack.c.l.b16 %v680
      %v821 = vunpack.c.l.b16 %v681
      %v822 = vunpack.c.l.b16 %v682
      %v823 = vunpack.c.l.b16 %v683
      %v824 = vunpack.c.l.b16 %v684
      %v825 = vunpack.c.l.b16 %v685
      %v826 = vunpack.c.l.b16 %v686
      %v827 = vunpack.c.l.b16 %v687
      %v828 = vunpack.c.l.b16 %v688
      %v829 = vunpack.c.l.b16 %v689
      %v830 = vunpack.c.l.b16 %v690
      %v831 = vunpack.c.l.b16 %v691
      %v832 = vunpack.c.l.b16 %v692
      %v833 = vunpack.c.l.b16 %v693
      %v834 = vunpack.c.l.b16 %v694
      %v835 = vunpack.c.l.b16 %v695
      %v836 = vunpack.c.l.b16 %v696
      %v837 = vunpack.c.l.b16 %v697
      %v838 = vunpack.c.l.b16 %v698
      %v839 = vunpack.c.l.b16 %v699
      %v840 = vunpack.c.l.b16 %v700
      %v841 = vunpack.c.l.b16 %v701
      %v842 = vpack.c.b16 %v811, %v810
      %v843 = vpack.c.b16 %v813, %v812
      %v844 = vpack.c.b16 %v815, %v814
      %v845 = vpack.c.b16 %v817, %v816
      %v846 = vpack.c.b16 %v819, %v818
      %v847 = vpack.c.b16 %v821, %v820
      %v848 = vpack.c.b16 %v823, %v822
      %v849 = vpack.c.b16 %v825, %v824
      %v850 = vpack.c.b16 %v827, %v826
      %v851 = vpack.c.b16 %v829, %v828
      %v852 = vpack.c.b16 %v831, %v830
      %v853 = vpack.c.b16 %v833, %v832
      %v854 = vpack.c.b16 %v835, %v834
      %v855 = vpack.c.b16 %v837, %v836
      %v856 = vpack.c.b16 %v839, %v838
      %v857 = vpack.c.b16 %v841, %v840
      %858 = vrot.lane.b32.xlu0 %v842, 92
      %v859 = vpop.permute.xlu0 %858
      %860 = vrot.lane.b32.xlu0 %v843, 92
      %v861 = vpop.permute.xlu0 %860
      %862 = vrot.lane.b32.xlu0 %v844, 92
      %v863 = vpop.permute.xlu0 %862
      %864 = vrot.lane.b32.xlu0 %v845, 92
      %v865 = vpop.permute.xlu0 %864
      %866 = vrot.lane.b32.xlu0 %v846, 92
      %v867 = vpop.permute.xlu0 %866
      %868 = vrot.lane.b32.xlu0 %v847, 92
      %v869 = vpop.permute.xlu0 %868
      %870 = vrot.lane.b32.xlu0 %v848, 92
      %v871 = vpop.permute.xlu0 %870
      %872 = vrot.lane.b32.xlu0 %v849, 92
      %v873 = vpop.permute.xlu0 %872
      %874 = vrot.lane.b32.xlu0 %v850, 92
      %v875 = vpop.permute.xlu0 %874
      %876 = vrot.lane.b32.xlu0 %v851, 92
      %v877 = vpop.permute.xlu0 %876
      %878 = vrot.lane.b32.xlu0 %v852, 92
      %v879 = vpop.permute.xlu0 %878
      %880 = vrot.lane.b32.xlu0 %v853, 92
      %v881 = vpop.permute.xlu0 %880
      %882 = vrot.lane.b32.xlu0 %v854, 92
      %v883 = vpop.permute.xlu0 %882
      %884 = vrot.lane.b32.xlu0 %v855, 92
      %v885 = vpop.permute.xlu0 %884
      %886 = vrot.lane.b32.xlu0 %v856, 92
      %v887 = vpop.permute.xlu0 %886
      %888 = vrot.lane.b32.xlu0 %v857, 92
      %v889 = vpop.permute.xlu0 %888
      %vm890 = vcmask 31744
      %v892 = vsel %vm890, %v763, 0
      %v895 = vsel %vm890, %v765, 0
      %v898 = vsel %vm890, %v767, 0
      %v901 = vsel %vm890, %v769, 0
      %v904 = vsel %vm890, %v771, 0
      %v907 = vsel %vm890, %v773, 0
      %v910 = vsel %vm890, %v775, 0
      %v913 = vsel %vm890, %v777, 0
      %v916 = vsel %vm890, %v859, 0
      %v919 = vsel %vm890, %v861, 0
      %v922 = vsel %vm890, %v863, 0
      %v925 = vsel %vm890, %v865, 0
      %v928 = vsel %vm890, %v867, 0
      %v931 = vsel %vm890, %v869, 0
      %v934 = vsel %vm890, %v871, 0
      %v937 = vsel %vm890, %v873, 0
      %v940 = vsel %vm890, %v875, 0
      %v943 = vsel %vm890, %v877, 0
      %v946 = vsel %vm890, %v879, 0
      %v949 = vsel %vm890, %v881, 0
      %v952 = vsel %vm890, %v883, 0
      %v955 = vsel %vm890, %v885, 0
      %v958 = vsel %vm890, %v887, 0
      %v961 = vsel %vm890, %v889, 0
      %963 = vmatprep.subr.bf16.mxu0 0
      %964 = vmatpush1.bf16.xpose.msra.mxu0 %v937
      %965 = vmatprep.subr.bf16.mxu0 0
      %966 = vmatpush1.bf16.xpose.msra.mxu0 %v934
      %967 = vmatprep.subr.bf16.mxu0 0
      %968 = vmatpush1.bf16.xpose.msra.mxu0 %v931
      %969 = vmatprep.subr.bf16.mxu0 0
      %970 = vmatpush1.bf16.xpose.msra.mxu0 %v928
      %971 = vmatprep.subr.bf16.mxu0 0
      %972 = vmatpush1.bf16.xpose.msra.mxu0 %v925
      %973 = vmatprep.subr.bf16.mxu0 0
      %974 = vmatpush1.bf16.xpose.msra.mxu0 %v922
      %975 = vmatprep.subr.bf16.mxu0 0
      %976 = vmatpush1.bf16.xpose.msra.mxu0 %v919
      %977 = vmatprep.subr.bf16.mxu0 0
      %978 = vmatpush1.bf16.xpose.msra.mxu0 %v916
      %979 = vmatprep.subr.bf16.mxu0 0
      %980 = vmatpush2.bf16.xpose.msra.mxu0 %v961
      %981 = vmatprep.subr.bf16.mxu0 0
      %982 = vmatpush2.bf16.xpose.msra.mxu0 %v958
      %983 = vmatprep.subr.bf16.mxu0 0
      %984 = vmatpush2.bf16.xpose.msra.mxu0 %v955
      %985 = vmatprep.subr.bf16.mxu0 0
      %986 = vmatpush2.bf16.xpose.msra.mxu0 %v952
      %987 = vmatprep.subr.bf16.mxu0 0
      %988 = vmatpush2.bf16.xpose.msra.mxu0 %v949
      %989 = vmatprep.subr.bf16.mxu0 0
      %990 = vmatpush2.bf16.xpose.msra.mxu0 %v946
      %991 = vmatprep.subr.bf16.mxu0 0
      %992 = vmatpush2.bf16.xpose.msra.mxu0 %v943
      %993 = vmatprep.subr.bf16.mxu0 0
      %994 = vmatpush2.bf16.xpose.msra.mxu0 %v940
      %995 = vmatprep.mubr.bf16.mxu0 0
      %996 = vmatmul.mubr.bf16.gmra.mxu0 %v892
      %v997 = vpop.f32.mrf.mxu0
      %v998 = vadd.f32 0.0, %v997
      %v999 = vpop.f32.mrf.mxu0
      %v1000 = vadd.f32 0.0, %v999
      %v1001 = vpop.f32.mrf.mxu0
      %v1002 = vadd.f32 0.0, %v1001
      %v1003 = vpop.f32.mrf.mxu0
      %v1004 = vadd.f32 0.0, %v1003
      %1005 = vmatprep.mubr.bf16.mxu0 0
      %1006 = vmatmul.mubr.bf16.gmra.mxu0 %v895
      %v1007 = vpop.f32.mrf.mxu0
      %v1008 = vadd.f32 0.0, %v1007
      %v1009 = vpop.f32.mrf.mxu0
      %v1010 = vadd.f32 0.0, %v1009
      %v1011 = vpop.f32.mrf.mxu0
      %v1012 = vadd.f32 0.0, %v1011
      %v1013 = vpop.f32.mrf.mxu0
      %v1014 = vadd.f32 0.0, %v1013
      %1015 = vmatprep.mubr.bf16.mxu0 0
      %1016 = vmatmul.mubr.bf16.gmra.mxu0 %v898
      %v1017 = vpop.f32.mrf.mxu0
      %v1018 = vadd.f32 0.0, %v1017
      %v1019 = vpop.f32.mrf.mxu0
      %v1020 = vadd.f32 0.0, %v1019
      %v1021 = vpop.f32.mrf.mxu0
      %v1022 = vadd.f32 0.0, %v1021
      %v1023 = vpop.f32.mrf.mxu0
      %v1024 = vadd.f32 0.0, %v1023
      %1025 = vmatprep.mubr.bf16.mxu0 0
      %1026 = vmatmul.mubr.bf16.gmra.mxu0 %v901
      %v1027 = vpop.f32.mrf.mxu0
      %v1028 = vadd.f32 0.0, %v1027
      %v1029 = vpop.f32.mrf.mxu0
      %v1030 = vadd.f32 0.0, %v1029
      %v1031 = vpop.f32.mrf.mxu0
      %v1032 = vadd.f32 0.0, %v1031
      %v1033 = vpop.f32.mrf.mxu0
      %v1034 = vadd.f32 0.0, %v1033
      %1035 = vmatprep.mubr.bf16.mxu0 0
      %1036 = vmatmul.mubr.bf16.gmra.mxu0 %v904
      %v1037 = vpop.f32.mrf.mxu0
      %v1038 = vadd.f32 0.0, %v1037
      %v1039 = vpop.f32.mrf.mxu0
      %v1040 = vadd.f32 0.0, %v1039
      %v1041 = vpop.f32.mrf.mxu0
      %v1042 = vadd.f32 0.0, %v1041
      %v1043 = vpop.f32.mrf.mxu0
      %v1044 = vadd.f32 0.0, %v1043
      %1045 = vmatprep.mubr.bf16.mxu0 0
      %1046 = vmatmul.mubr.bf16.gmra.mxu0 %v907
      %v1047 = vpop.f32.mrf.mxu0
      %v1048 = vadd.f32 0.0, %v1047
      %v1049 = vpop.f32.mrf.mxu0
      %v1050 = vadd.f32 0.0, %v1049
      %v1051 = vpop.f32.mrf.mxu0
      %v1052 = vadd.f32 0.0, %v1051
      %v1053 = vpop.f32.mrf.mxu0
      %v1054 = vadd.f32 0.0, %v1053
      %1055 = vmatprep.mubr.bf16.mxu0 0
      %1056 = vmatmul.mubr.bf16.gmra.mxu0 %v910
      %v1057 = vpop.f32.mrf.mxu0
      %v1058 = vadd.f32 0.0, %v1057
      %v1059 = vpop.f32.mrf.mxu0
      %v1060 = vadd.f32 0.0, %v1059
      %v1061 = vpop.f32.mrf.mxu0
      %v1062 = vadd.f32 0.0, %v1061
      %v1063 = vpop.f32.mrf.mxu0
      %v1064 = vadd.f32 0.0, %v1063
      %1065 = vmatprep.mubr.bf16.mxu0 0
      %1066 = vmatmul.mubr.bf16.gmra.mxu0 %v913
      %v1067 = vpop.f32.mrf.mxu0
      %v1068 = vadd.f32 0.0, %v1067
      %v1069 = vpop.f32.mrf.mxu0
      %v1070 = vadd.f32 0.0, %v1069
      %v1071 = vpop.f32.mrf.mxu0
      %v1072 = vadd.f32 0.0, %v1071
      %v1073 = vpop.f32.mrf.mxu0
      %v1074 = vadd.f32 0.0, %v1073
      %1075 = vdwg.mxu0
      %v1076 = vmax.f32 %v998, %v1000
      %1077 = vmax.xlane.f32.xlu0 %v1076
      %v1078 = vpop.xlane.xlu0 %1077
      %v1079 = vmax.f32 %v1002, %v1004
      %1080 = vmax.xlane.f32.xlu0 %v1079
      %v1081 = vpop.xlane.xlu0 %1080
      %v1082 = vmax.f32 %v1008, %v1010
      %1083 = vmax.xlane.f32.xlu0 %v1082
      %v1084 = vpop.xlane.xlu0 %1083
      %v1085 = vmax.f32 %v1012, %v1014
      %1086 = vmax.xlane.f32.xlu0 %v1085
      %v1087 = vpop.xlane.xlu0 %1086
      %v1088 = vmax.f32 %v1018, %v1020
      %1089 = vmax.xlane.f32.xlu0 %v1088
      %v1090 = vpop.xlane.xlu0 %1089
      %v1091 = vmax.f32 %v1022, %v1024
      %1092 = vmax.xlane.f32.xlu0 %v1091
      %v1093 = vpop.xlane.xlu0 %1092
      %v1094 = vmax.f32 %v1028, %v1030
      %1095 = vmax.xlane.f32.xlu0 %v1094
      %v1096 = vpop.xlane.xlu0 %1095
      %v1097 = vmax.f32 %v1032, %v1034
      %1098 = vmax.xlane.f32.xlu0 %v1097
      %v1099 = vpop.xlane.xlu0 %1098
      %v1100 = vmax.f32 %v1038, %v1040
      %1101 = vmax.xlane.f32.xlu0 %v1100
      %v1102 = vpop.xlane.xlu0 %1101
      %v1103 = vmax.f32 %v1042, %v1044
      %1104 = vmax.xlane.f32.xlu0 %v1103
      %v1105 = vpop.xlane.xlu0 %1104
      %v1106 = vmax.f32 %v1048, %v1050
      %1107 = vmax.xlane.f32.xlu0 %v1106
      %v1108 = vpop.xlane.xlu0 %1107
      %v1109 = vmax.f32 %v1052, %v1054
      %1110 = vmax.xlane.f32.xlu0 %v1109
      %v1111 = vpop.xlane.xlu0 %1110
      %v1112 = vmax.f32 %v1058, %v1060
      %1113 = vmax.xlane.f32.xlu0 %v1112
      %v1114 = vpop.xlane.xlu0 %1113
      %v1115 = vmax.f32 %v1062, %v1064
      %1116 = vmax.xlane.f32.xlu0 %v1115
      %v1117 = vpop.xlane.xlu0 %1116
      %v1118 = vmax.f32 %v1068, %v1070
      %1119 = vmax.xlane.f32.xlu0 %v1118
      %v1120 = vpop.xlane.xlu0 %1119
      %v1121 = vmax.f32 %v1072, %v1074
      %1122 = vmax.xlane.f32.xlu0 %v1121
      %v1123 = vpop.xlane.xlu0 %1122
      %v1124 = vsub.f32 %v998, %v1078
      %v1125 = vsub.f32 %v1000, %v1078
      %v1126 = vsub.f32 %v1002, %v1081
      %v1127 = vsub.f32 %v1004, %v1081
      %v1128 = vsub.f32 %v1008, %v1084
      %v1129 = vsub.f32 %v1010, %v1084
      %v1130 = vsub.f32 %v1012, %v1087
      %v1131 = vsub.f32 %v1014, %v1087
      %v1132 = vsub.f32 %v1018, %v1090
      %v1133 = vsub.f32 %v1020, %v1090
      %v1134 = vsub.f32 %v1022, %v1093
      %v1135 = vsub.f32 %v1024, %v1093
      %v1136 = vsub.f32 %v1028, %v1096
      %v1137 = vsub.f32 %v1030, %v1096
      %v1138 = vsub.f32 %v1032, %v1099
      %v1139 = vsub.f32 %v1034, %v1099
      %v1140 = vsub.f32 %v1038, %v1102
      %v1141 = vsub.f32 %v1040, %v1102
      %v1142 = vsub.f32 %v1042, %v1105
      %v1143 = vsub.f32 %v1044, %v1105
      %v1144 = vsub.f32 %v1048, %v1108
      %v1145 = vsub.f32 %v1050, %v1108
      %v1146 = vsub.f32 %v1052, %v1111
      %v1147 = vsub.f32 %v1054, %v1111
      %v1148 = vsub.f32 %v1058, %v1114
      %v1149 = vsub.f32 %v1060, %v1114
      %v1150 = vsub.f32 %v1062, %v1117
      %v1151 = vsub.f32 %v1064, %v1117
      %v1152 = vsub.f32 %v1068, %v1120
      %v1153 = vsub.f32 %v1070, %v1120
      %v1154 = vsub.f32 %v1072, %v1123
      %v1155 = vsub.f32 %v1074, %v1123
      %v1156 = vmul.f32 %v1124, 1.442695
      %v1157 = vpow.pop %v1156
      %v1158 = vmul.f32 %v1125, 1.442695
      %v1159 = vpow.pop %v1158
      %v1160 = vmul.f32 %v1126, 1.442695
      %v1161 = vpow.pop %v1160
      %v1162 = vmul.f32 %v1127, 1.442695
      %v1163 = vpow.pop %v1162
      %v1164 = vmul.f32 %v1128, 1.442695
      %v1165 = vpow.pop %v1164
      %v1166 = vmul.f32 %v1129, 1.442695
      %v1167 = vpow.pop %v1166
      %v1168 = vmul.f32 %v1130, 1.442695
      %v1169 = vpow.pop %v1168
      %v1170 = vmul.f32 %v1131, 1.442695
      %v1171 = vpow.pop %v1170
      %v1172 = vmul.f32 %v1132, 1.442695
      %v1173 = vpow.pop %v1172
      %v1174 = vmul.f32 %v1133, 1.442695
      %v1175 = vpow.pop %v1174
      %v1176 = vmul.f32 %v1134, 1.442695
      %v1177 = vpow.pop %v1176
      %v1178 = vmul.f32 %v1135, 1.442695
      %v1179 = vpow.pop %v1178
      %v1180 = vmul.f32 %v1136, 1.442695
      %v1181 = vpow.pop %v1180
      %v1182 = vmul.f32 %v1137, 1.442695
      %v1183 = vpow.pop %v1182
      %v1184 = vmul.f32 %v1138, 1.442695
      %v1185 = vpow.pop %v1184
      %v1186 = vmul.f32 %v1139, 1.442695
      %v1187 = vpow.pop %v1186
      %v1188 = vmul.f32 %v1140, 1.442695
      %v1189 = vpow.pop %v1188
      %v1190 = vmul.f32 %v1141, 1.442695
      %v1191 = vpow.pop %v1190
      %v1192 = vmul.f32 %v1142, 1.442695
      %v1193 = vpow.pop %v1192
      %v1194 = vmul.f32 %v1143, 1.442695
      %v1195 = vpow.pop %v1194
      %v1196 = vmul.f32 %v1144, 1.442695
      %v1197 = vpow.pop %v1196
      %v1198 = vmul.f32 %v1145, 1.442695
      %v1199 = vpow.pop %v1198
      %v1200 = vmul.f32 %v1146, 1.442695
      %v1201 = vpow.pop %v1200
      %v1202 = vmul.f32 %v1147, 1.442695
      %v1203 = vpow.pop %v1202
      %v1204 = vmul.f32 %v1148, 1.442695
      %v1205 = vpow.pop %v1204
      %v1206 = vmul.f32 %v1149, 1.442695
      %v1207 = vpow.pop %v1206
      %v1208 = vmul.f32 %v1150, 1.442695
      %v1209 = vpow.pop %v1208
      %v1210 = vmul.f32 %v1151, 1.442695
      %v1211 = vpow.pop %v1210
      %v1212 = vmul.f32 %v1152, 1.442695
      %v1213 = vpow.pop %v1212
      %v1214 = vmul.f32 %v1153, 1.442695
      %v1215 = vpow.pop %v1214
      %v1216 = vmul.f32 %v1154, 1.442695
      %v1217 = vpow.pop %v1216
      %v1218 = vmul.f32 %v1155, 1.442695
      %v1219 = vpow.pop %v1218
      %v1220 = vadd.f32 %v1157, %v1159
      %1221 = vadd.xlane.f32.xlu0 %v1220
      %v1222 = vpop.xlane.xlu0 %1221
      %v1223 = vadd.f32 %v1161, %v1163
      %1224 = vadd.xlane.f32.xlu0 %v1223
      %v1225 = vpop.xlane.xlu0 %1224
      %v1226 = vadd.f32 %v1165, %v1167
      %1227 = vadd.xlane.f32.xlu0 %v1226
      %v1228 = vpop.xlane.xlu0 %1227
      %v1229 = vadd.f32 %v1169, %v1171
      %1230 = vadd.xlane.f32.xlu0 %v1229
      %v1231 = vpop.xlane.xlu0 %1230
      %v1232 = vadd.f32 %v1173, %v1175
      %1233 = vadd.xlane.f32.xlu0 %v1232
      %v1234 = vpop.xlane.xlu0 %1233
      %v1235 = vadd.f32 %v1177, %v1179
      %1236 = vadd.xlane.f32.xlu0 %v1235
      %v1237 = vpop.xlane.xlu0 %1236
      %v1238 = vadd.f32 %v1181, %v1183
      %1239 = vadd.xlane.f32.xlu0 %v1238
      %v1240 = vpop.xlane.xlu0 %1239
      %v1241 = vadd.f32 %v1185, %v1187
      %1242 = vadd.xlane.f32.xlu0 %v1241
      %v1243 = vpop.xlane.xlu0 %1242
      %v1244 = vadd.f32 %v1189, %v1191
      %1245 = vadd.xlane.f32.xlu0 %v1244
      %v1246 = vpop.xlane.xlu0 %1245
      %v1247 = vadd.f32 %v1193, %v1195
      %1248 = vadd.xlane.f32.xlu0 %v1247
      %v1249 = vpop.xlane.xlu0 %1248
      %v1250 = vadd.f32 %v1197, %v1199
      %1251 = vadd.xlane.f32.xlu0 %v1250
      %v1252 = vpop.xlane.xlu0 %1251
      %v1253 = vadd.f32 %v1201, %v1203
      %1254 = vadd.xlane.f32.xlu0 %v1253
      %v1255 = vpop.xlane.xlu0 %1254
      %v1256 = vadd.f32 %v1205, %v1207
      %1257 = vadd.xlane.f32.xlu0 %v1256
      %v1258 = vpop.xlane.xlu0 %1257
      %v1259 = vadd.f32 %v1209, %v1211
      %1260 = vadd.xlane.f32.xlu0 %v1259
      %v1261 = vpop.xlane.xlu0 %1260
      %v1262 = vadd.f32 %v1213, %v1215
      %1263 = vadd.xlane.f32.xlu0 %v1262
      %v1264 = vpop.xlane.xlu0 %1263
      %v1265 = vadd.f32 %v1217, %v1219
      %1266 = vadd.xlane.f32.xlu0 %v1265
      %v1267 = vpop.xlane.xlu0 %1266
      %v1268 = vrcp.pop %v1222
      %v1269 = vrcp.pop %v1225
      %v1270 = vrcp.pop %v1228
      %v1271 = vrcp.pop %v1231
      %v1272 = vrcp.pop %v1234
      %v1273 = vrcp.pop %v1237
      %v1274 = vrcp.pop %v1240
      %v1275 = vrcp.pop %v1243
      %v1276 = vrcp.pop %v1246
      %v1277 = vrcp.pop %v1249
      %v1278 = vrcp.pop %v1252
      %v1279 = vrcp.pop %v1255
      %v1280 = vrcp.pop %v1258
      %v1281 = vrcp.pop %v1261
      %v1282 = vrcp.pop %v1264
      %v1283 = vrcp.pop %v1267
      %v1284 = vmul.f32 %v1157, %v1268
      %v1285 = vmul.f32 %v1159, %v1268
      %v1286 = vmul.f32 %v1161, %v1269
      %v1287 = vmul.f32 %v1163, %v1269
      %v1288 = vmul.f32 %v1165, %v1270
      %v1289 = vmul.f32 %v1167, %v1270
      %v1290 = vmul.f32 %v1169, %v1271
      %v1291 = vmul.f32 %v1171, %v1271
      %v1292 = vmul.f32 %v1173, %v1272
      %v1293 = vmul.f32 %v1175, %v1272
      %v1294 = vmul.f32 %v1177, %v1273
      %v1295 = vmul.f32 %v1179, %v1273
      %v1296 = vmul.f32 %v1181, %v1274
      %v1297 = vmul.f32 %v1183, %v1274
      %v1298 = vmul.f32 %v1185, %v1275
      %v1299 = vmul.f32 %v1187, %v1275
      %v1300 = vmul.f32 %v1189, %v1276
      %v1301 = vmul.f32 %v1191, %v1276
      %v1302 = vmul.f32 %v1193, %v1277
      %v1303 = vmul.f32 %v1195, %v1277
      %v1304 = vmul.f32 %v1197, %v1278
      %v1305 = vmul.f32 %v1199, %v1278
      %v1306 = vmul.f32 %v1201, %v1279
      %v1307 = vmul.f32 %v1203, %v1279
      %v1308 = vmul.f32 %v1205, %v1280
      %v1309 = vmul.f32 %v1207, %v1280
      %v1310 = vmul.f32 %v1209, %v1281
      %v1311 = vmul.f32 %v1211, %v1281
      %v1312 = vmul.f32 %v1213, %v1282
      %v1313 = vmul.f32 %v1215, %v1282
      %v1314 = vmul.f32 %v1217, %v1283
      %v1315 = vmul.f32 %v1219, %v1283
      %v1316 = vpack.c.bf16 %v1286, %v1284
      %v1317 = vpack.c.bf16 %v1287, %v1285
      %v1318 = vpack.c.bf16 %v1290, %v1288
      %v1319 = vpack.c.bf16 %v1291, %v1289
      %v1320 = vpack.c.bf16 %v1294, %v1292
      %v1321 = vpack.c.bf16 %v1295, %v1293
      %v1322 = vpack.c.bf16 %v1298, %v1296
      %v1323 = vpack.c.bf16 %v1299, %v1297
      %v1324 = vpack.c.bf16 %v1302, %v1300
      %v1325 = vpack.c.bf16 %v1303, %v1301
      %v1326 = vpack.c.bf16 %v1306, %v1304
      %v1327 = vpack.c.bf16 %v1307, %v1305
      %v1328 = vpack.c.bf16 %v1310, %v1308
      %v1329 = vpack.c.bf16 %v1311, %v1309
      %v1330 = vpack.c.bf16 %v1314, %v1312
      %v1331 = vpack.c.bf16 %v1315, %v1313
      %1348 = vmatprep.subr.bf16.mxu0 0
      %1349 = vmatpush1.bf16.msra.mxu0 %v849
      %1350 = vmatprep.subr.bf16.mxu0 0
      %1351 = vmatpush1.bf16.msra.mxu0 %v848
      %1352 = vmatprep.subr.bf16.mxu0 0
      %1353 = vmatpush1.bf16.msra.mxu0 %v847
      %1354 = vmatprep.subr.bf16.mxu0 0
      %1355 = vmatpush1.bf16.msra.mxu0 %v846
      %1356 = vmatprep.subr.bf16.mxu0 0
      %1357 = vmatpush1.bf16.msra.mxu0 %v845
      %1358 = vmatprep.subr.bf16.mxu0 0
      %1359 = vmatpush1.bf16.msra.mxu0 %v844
      %1360 = vmatprep.subr.bf16.mxu0 0
      %1361 = vmatpush1.bf16.msra.mxu0 %v843
      %1362 = vmatprep.subr.bf16.mxu0 0
      %1363 = vmatpush1.bf16.msra.mxu0 %v842
      %1364 = vmatprep.subr.bf16.mxu0 0
      %1365 = vmatpush2.bf16.msra.mxu0 %v857
      %1366 = vmatprep.subr.bf16.mxu0 0
      %1367 = vmatpush2.bf16.msra.mxu0 %v856
      %1368 = vmatprep.subr.bf16.mxu0 0
      %1369 = vmatpush2.bf16.msra.mxu0 %v855
      %1370 = vmatprep.subr.bf16.mxu0 0
      %1371 = vmatpush2.bf16.msra.mxu0 %v854
      %1372 = vmatprep.subr.bf16.mxu0 0
      %1373 = vmatpush2.bf16.msra.mxu0 %v853
      %1374 = vmatprep.subr.bf16.mxu0 0
      %1375 = vmatpush2.bf16.msra.mxu0 %v852
      %1376 = vmatprep.subr.bf16.mxu0 0
      %1377 = vmatpush2.bf16.msra.mxu0 %v851
      %1378 = vmatprep.subr.bf16.mxu0 0
      %1379 = vmatpush2.bf16.msra.mxu0 %v850
      %1380 = vmatprep.mubr.bf16.mxu0 %v1317
      %1381 = vmatmul.mubr.bf16.gmra.mxu0 %v1316
      %v1382 = vpop.f32.mrf.mxu0
      %v1383 = vadd.f32 0.0, %v1382
      %v1384 = vpop.f32.mrf.mxu0
      %v1385 = vpop.f32.mrf.mxu0
      %v1386 = vadd.f32 0.0, %v1385
      %v1387 = vpop.f32.mrf.mxu0
      %1388 = vmatprep.mubr.bf16.mxu0 %v1319
      %1389 = vmatmul.mubr.bf16.gmra.mxu0 %v1318
      %v1390 = vpop.f32.mrf.mxu0
      %v1391 = vadd.f32 0.0, %v1390
      %v1392 = vpop.f32.mrf.mxu0
      %v1393 = vpop.f32.mrf.mxu0
      %v1394 = vadd.f32 0.0, %v1393
      %v1395 = vpop.f32.mrf.mxu0
      %1396 = vmatprep.mubr.bf16.mxu0 %v1321
      %1397 = vmatmul.mubr.bf16.gmra.mxu0 %v1320
      %v1398 = vpop.f32.mrf.mxu0
      %v1399 = vadd.f32 0.0, %v1398
      %v1400 = vpop.f32.mrf.mxu0
      %v1401 = vpop.f32.mrf.mxu0
      %v1402 = vadd.f32 0.0, %v1401
      %v1403 = vpop.f32.mrf.mxu0
      %1404 = vmatprep.mubr.bf16.mxu0 %v1323
      %1405 = vmatmul.mubr.bf16.gmra.mxu0 %v1322
      %v1406 = vpop.f32.mrf.mxu0
      %v1407 = vadd.f32 0.0, %v1406
      %v1408 = vpop.f32.mrf.mxu0
      %v1409 = vpop.f32.mrf.mxu0
      %v1410 = vadd.f32 0.0, %v1409
      %v1411 = vpop.f32.mrf.mxu0
      %1412 = vmatprep.mubr.bf16.mxu0 %v1325
      %1413 = vmatmul.mubr.bf16.gmra.mxu0 %v1324
      %v1414 = vpop.f32.mrf.mxu0
      %v1415 = vadd.f32 0.0, %v1414
      %v1416 = vpop.f32.mrf.mxu0
      %v1417 = vpop.f32.mrf.mxu0
      %v1418 = vadd.f32 0.0, %v1417
      %v1419 = vpop.f32.mrf.mxu0
      %1420 = vmatprep.mubr.bf16.mxu0 %v1327
      %1421 = vmatmul.mubr.bf16.gmra.mxu0 %v1326
      %v1422 = vpop.f32.mrf.mxu0
      %v1423 = vadd.f32 0.0, %v1422
      %v1424 = vpop.f32.mrf.mxu0
      %v1425 = vpop.f32.mrf.mxu0
      %v1426 = vadd.f32 0.0, %v1425
      %v1427 = vpop.f32.mrf.mxu0
      %1428 = vmatprep.mubr.bf16.mxu0 %v1329
      %1429 = vmatmul.mubr.bf16.gmra.mxu0 %v1328
      %v1430 = vpop.f32.mrf.mxu0
      %v1431 = vadd.f32 0.0, %v1430
      %v1432 = vpop.f32.mrf.mxu0
      %v1433 = vpop.f32.mrf.mxu0
      %v1434 = vadd.f32 0.0, %v1433
      %v1435 = vpop.f32.mrf.mxu0
      %1436 = vmatprep.mubr.bf16.mxu0 %v1331
      %1437 = vmatmul.mubr.bf16.gmra.mxu0 %v1330
      %v1438 = vpop.f32.mrf.mxu0
      %v1439 = vadd.f32 0.0, %v1438
      %v1440 = vpop.f32.mrf.mxu0
      %v1441 = vpop.f32.mrf.mxu0
      %v1442 = vadd.f32 0.0, %v1441
      %v1443 = vpop.f32.mrf.mxu0
      %1444 = vdwg.mxu0
      %s1445 = scalar_lea.vmem %s211, %s669
      %v1446 = vld [vmem:[%s1445] sm:$0xff]
      %v1447 = vld [vmem:[%s1445 + $0x8] sm:$0xff]
      %v1448 = vld [vmem:[%s1445 + $0x10] sm:$0xff]
      %v1449 = vld [vmem:[%s1445 + $0x18] sm:$0xff]
      %v1450 = vld [vmem:[%s1445 + $0x20] sm:$0xff]
      %v1451 = vld [vmem:[%s1445 + $0x28] sm:$0xff]
      %v1452 = vld [vmem:[%s1445 + $0x30] sm:$0xff]
      %v1453 = vld [vmem:[%s1445 + $0x38] sm:$0xff]
      %v1454 = vld [vmem:[%s1445 + $0x40] sm:$0xff]
      %v1455 = vld [vmem:[%s1445 + $0x48] sm:$0xff]
      %v1456 = vld [vmem:[%s1445 + $0x50] sm:$0xff]
      %v1457 = vld [vmem:[%s1445 + $0x58] sm:$0xff]
      %v1458 = vld [vmem:[%s1445 + $0x60] sm:$0xff]
      %v1459 = vld [vmem:[%s1445 + $0x68] sm:$0xff]
      %v1460 = vld [vmem:[%s1445 + $0x70] sm:$0xff]
      %v1461 = vld [vmem:[%s1445 + $0x78] sm:$0xff]
      %s1462 = sld [smem:[#allocation3]]
      %v1463 = vstv %s1462
      %v1464 = vmul.f32 %v1463, %v1383
      %v1465 = vmul.f32 %v1463, %v1386
      %v1466 = vmul.f32 %v1463, %v1391
      %v1467 = vmul.f32 %v1463, %v1394
      %v1468 = vmul.f32 %v1463, %v1399
      %v1469 = vmul.f32 %v1463, %v1402
      %v1470 = vmul.f32 %v1463, %v1407
      %v1471 = vmul.f32 %v1463, %v1410
      %v1472 = vmul.f32 %v1463, %v1415
      %v1473 = vmul.f32 %v1463, %v1418
      %v1474 = vmul.f32 %v1463, %v1423
      %v1475 = vmul.f32 %v1463, %v1426
      %v1476 = vmul.f32 %v1463, %v1431
      %v1477 = vmul.f32 %v1463, %v1434
      %v1478 = vmul.f32 %v1463, %v1439
      %v1479 = vmul.f32 %v1463, %v1442
      %v1480 = vadd.f32 %v1464, %v1446
      %v1481 = vadd.f32 %v1465, %v1447
      %v1482 = vadd.f32 %v1466, %v1448
      %v1483 = vadd.f32 %v1467, %v1449
      %v1484 = vadd.f32 %v1468, %v1450
      %v1485 = vadd.f32 %v1469, %v1451
      %v1486 = vadd.f32 %v1470, %v1452
      %v1487 = vadd.f32 %v1471, %v1453
      %v1488 = vadd.f32 %v1472, %v1454
      %v1489 = vadd.f32 %v1473, %v1455
      %v1490 = vadd.f32 %v1474, %v1456
      %v1491 = vadd.f32 %v1475, %v1457
      %v1492 = vadd.f32 %v1476, %v1458
      %v1493 = vadd.f32 %v1477, %v1459
      %v1494 = vadd.f32 %v1478, %v1460
      %v1495 = vadd.f32 %v1479, %v1461
      %vm1496 = vcmask 261120
      %1497 = vst.msk [vmem:[%s220] sm:$0xff] %vm1496, %v1480
      %1498 = vst.msk [vmem:[%s220 + $0x8] sm:$0xff] %vm1496, %v1481
      %1499 = vst.msk [vmem:[%s220 + $0x10] sm:$0xff] %vm1496, %v1482
      %1500 = vst.msk [vmem:[%s220 + $0x18] sm:$0xff] %vm1496, %v1483
      %1501 = vst.msk [vmem:[%s220 + $0x20] sm:$0xff] %vm1496, %v1484
      %1502 = vst.msk [vmem:[%s220 + $0x28] sm:$0xff] %vm1496, %v1485
      %1503 = vst.msk [vmem:[%s220 + $0x30] sm:$0xff] %vm1496, %v1486
      %1504 = vst.msk [vmem:[%s220 + $0x38] sm:$0xff] %vm1496, %v1487
      %1505 = vst.msk [vmem:[%s220 + $0x40] sm:$0xff] %vm1496, %v1488
      %1506 = vst.msk [vmem:[%s220 + $0x48] sm:$0xff] %vm1496, %v1489
      %1507 = vst.msk [vmem:[%s220 + $0x50] sm:$0xff] %vm1496, %v1490
      %1508 = vst.msk [vmem:[%s220 + $0x58] sm:$0xff] %vm1496, %v1491
      %1509 = vst.msk [vmem:[%s220 + $0x60] sm:$0xff] %vm1496, %v1492
      %1510 = vst.msk [vmem:[%s220 + $0x68] sm:$0xff] %vm1496, %v1493
      %1511 = vst.msk [vmem:[%s220 + $0x70] sm:$0xff] %vm1496, %v1494
      %1512 = vst.msk [vmem:[%s220 + $0x78] sm:$0xff] %vm1496, %v1495
      %s1513 = smul.u32 16, %s21
      %p1514 = scmp.lt.s32.totalorder %s20, 1
      %s1515 = scalar_select %p1514, %s20, 1
      %p1516 = scmp.lt.s32.totalorder %s1513, 31
      %s1517 = scalar_select %p1516, %s1513, 31
      %s1518 = smul.addr %s1515, 32
      %s1519 = sadd.s32 %s1517, %s1518
      %s1520 = smul.addr %s1519, 8
      %s1521 = scalar_lea.vmem %s4, %s1520
      // Predicated region
      $region41: #{tpu_custom_call.1} parent=35 // pred_check
        %p1522 = pneg %p137
      $region42: #{tpu_custom_call.1} parent=35 // pred_check_branch
        %1524 = sbr.rel (%p1522) target = $region44
      $region43: #{tpu_custom_call.1} parent=35 // pred_region
        %s1525 = smul.u32 16, %s21
      $region44: #{tpu_custom_call.1} parent=35 // pred_fallthru
        _
    $region36: #{tpu_custom_call.1} parent=5 // pred_fallthru
      _
    %p1526 = scmp.le.s32.totalorder 2, %s11
    // Predicated region
    $region45: #{tpu_custom_call.1} parent=5 // pred_check
      %p1527 = pneg %p1526
    $region46: #{tpu_custom_call.1} parent=5 // pred_check_branch
      %1529 = sbr.rel (%p1527) target = $region48
    $region47: #{tpu_custom_call.1} parent=5 // pred_region
      %s1530 = ssub.s32 %s11, 2
      // Predicated region
      $region49: #{tpu_custom_call.1} parent=47 // pred_check
        %p1531 = pneg %p143
      $region50: #{tpu_custom_call.1} parent=47 // pred_check_branch
        %1533 = sbr.rel (%p1531) target = $region52
      $region51: #{tpu_custom_call.1} parent=47 // pred_region
        %s1534 = smul.u32 16, %s23
        %p1535 = scmp.lt.s32.totalorder %s22, 1
        %s1536 = scalar_select %p1535, %s22, 1
        %p1537 = scmp.lt.s32.totalorder %s1534, 31
        %s1538 = scalar_select %p1537, %s1534, 31
        %s1539 = smul.addr %s1536, 32
        %s1540 = sadd.s32 %s1538, %s1539
        %s1541 = smul.addr %s1540, 8
        %s1542 = scalar_lea.vmem %s4, %s1541
      $region52: #{tpu_custom_call.1} parent=47 // pred_fallthru
        _
    $region48: #{tpu_custom_call.1} parent=5 // pred_fallthru
      _
  $region6: #{tpu_custom_call.1} parent=0 // loop_footer
    %s15 = sadd.s32 1, %s11
  $region7: #{tpu_custom_call.1} parent=0 // loop_footer_branch
    %10 = sbr.rel target = $region3
  $region8: #{tpu_custom_call.1} parent=0 // loop_exit
    _

</llo_original>
